<compile_context>
chip_gen: v7x
topology: tpu7x:2x2x1
jax: 0.10.0
libtpu: 0.0.40
codegen_flags: <defaults>
</compile_context>

<pallas_src>
import math
import functools

import jax
import jax.numpy as jnp
from jax import lax
from jax.experimental import pallas as pl
from jax.experimental.pallas import tpu as pltpu


def _sigmoid(v):
    return 1.0 / (1.0 + jnp.exp(-v))


def _silu(v):
    return v * _sigmoid(v)


def _softplus(v):
    # numerically-stable softplus, identical formula in kernel and reference
    return jnp.where(v > 20.0, v, jnp.log1p(jnp.exp(jnp.minimum(v, 20.0))))


def selective_scan_kernel(
    x_ref,        # (Mc, D)   time-major chunk of the input, row = t_local*B + b
    w_in_ref,     # (D, P)    fused [Wx | Wz | Wdtin@Wdt | WB(pad->Np) | WC]
    bdt_ref,      # (1, D)    dt_proj bias
    convw_ref,    # (K, D)    depthwise conv weight (tap, channel)
    a_log_t_ref,  # (N, D)    A_log transposed (lane-dense over D)
    dparam_ref,   # (1, D)    D (skip) parameter
    wout_ref,     # (D, D)    out_proj weight
    out_ref,      # (Mc, D)
    h_state,      # (B, N, D)     f32, persistent hidden state across chunks
    xpad_scr,     # (pad+Mc, D)   f32, persistent: [conv halo | chunk x_res]
    a_scr,        # (Mc, N, D)    f32, A_tilde for this chunk
    inp_scr,      # (Mc, N, D)    f32, discretized input term for this chunk
    cb_scr,       # (Mc, N, D)    f32, C_proj broadcast over D for this chunk
    y_scr,        # (Mc, D)       f32, per-timestep scan output for this chunk
    *,
    chunk_len: int,
    batch: int,
    state_dim: int,
    d_conv: int,
    n_pad: int,
):
    Lc, B, N, K, Np = chunk_len, batch, state_dim, d_conv, n_pad
    D = x_ref.shape[-1]
    Mc = Lc * B
    pad_rows = (K - 1) * B
    i = pl.program_id(0)
    mxu_dtype = w_in_ref.dtype   # bf16 by default; f32 for strict checks

    # ---- first chunk: zero the carried state / conv halo --------------------
    @pl.when(i == 0)
    def _init():
        h_state[...] = jnp.zeros_like(h_state)
        if pad_rows > 0:
            xpad_scr[pl.ds(0, pad_rows), :] = jnp.zeros((pad_rows, D), jnp.float32)

    x = x_ref[...].astype(jnp.float32)                                # (Mc, D)

    # ---- one fused MXU matmul: x_res, z, dt(pre-softplus), B, C -------------
    proj = jnp.dot(x.astype(mxu_dtype), w_in_ref[...],
                   preferred_element_type=jnp.float32)                # (Mc, P)
    x_res  = proj[:, 0:D]
    z      = proj[:, D:2 * D]
    dt     = _softplus(proj[:, 2 * D:3 * D] + bdt_ref[...].astype(jnp.float32))
    B_proj = proj[:, 3 * D:3 * D + N]                                 # (Mc, N)
    C_proj = proj[:, 3 * D + Np:3 * D + Np + N]                       # (Mc, N)

    # ---- causal depthwise conv (halo = last K-1 timesteps of prev chunk) ----
    # time-major layout => a shift by one timestep is a shift by B rows.
    xpad_scr[pl.ds(pad_rows, Mc), :] = x_res
    convw = convw_ref[...].astype(jnp.float32)                        # (K, D)
    conv = jnp.zeros((Mc, D), jnp.float32)
    for k in range(K):
        tap = xpad_scr[pl.ds(k * B, Mc), :]     # x_res shifted by (K-1-k) steps
        conv = conv + tap * convw[k][None, :]
    u = _silu(conv)                                                   # (Mc, D)
    if pad_rows > 0:
        @pl.when(i + 1 < pl.num_programs(0))
        def _carry_halo():
            xpad_scr[pl.ds(0, pad_rows), :] = xpad_scr[pl.ds(Mc, pad_rows), :]

    # ---- ZOH discretization, vectorized over the chunk, lane-dense over D ---
    A = -jnp.exp(a_log_t_ref[...].astype(jnp.float32))                # (N, D)
    near0 = jnp.abs(A) < 1e-8                                         # (N, D)
    recip = jnp.where(near0, 0.0, 1.0 / (A + 1e-10))                  # (N, D)
    sel   = jnp.where(near0, 1.0, 0.0)                                # (N, D)
    dt_b  = dt[:, None, :]                                            # (Mc,1,D)
    a_til = jnp.exp(dt_b * A[None, :, :])                             # (Mc,N,D)
    b_til = (a_til - 1.0) * recip[None, :, :] + sel[None, :, :] * dt_b
    a_scr[...]   = a_til
    inp_scr[...] = b_til * B_proj[:, :, None] * u[:, None, :]         # (Mc,N,D)
    cb_scr[...]  = jnp.broadcast_to(C_proj[:, :, None], (Mc, N, D))

    # ---- serial recurrence; C-contraction fused into the loop ---------------
    def step(t, h):
        r0 = pl.multiple_of(t * B, B)
        rows = pl.ds(r0, B)
        h = a_scr[rows, :, :] * h + inp_scr[rows, :, :]               # (B, N, D)
        y_scr[rows, :] = jnp.sum(cb_scr[rows, :, :] * h, axis=1)      # (B, D)
        return h

    h_fin = lax.fori_loop(0, Lc, step, h_state[...], unroll=min(Lc, 8))
    h_state[...] = h_fin

    # ---- D-skip, gating, out projection --------------------------------------
    y = y_scr[...] + u * dparam_ref[...].astype(jnp.float32)
    y = y * _silu(z)
    out = jnp.dot(y.astype(mxu_dtype), wout_ref[...],
                  preferred_element_type=jnp.float32)                 # (Mc, D)
    out_ref[...] = out.astype(out_ref.dtype)


def _choose_chunk_len(L, B, N, D, K, budget_bytes):
    """Largest divisor of L whose per-chunk f32 scratch fits the budget."""
    row_bytes = B * (3 * N * D + 2 * D) * 4     # a/inp/cb + xpad + y per Lc unit
    cap = max(1, budget_bytes // max(row_bytes, 1))
    divisors = [d for d in range(1, L + 1) if L % d == 0]
    valid = [d for d in divisors
             if d == L or (d >= max(K - 1, 1) and (d * B) % 8 == 0)]
    under = [d for d in valid if d <= cap]
    return max(under) if under else min(valid)


def selective_scan_forward(x, weights, *, state_dim, d_conv, dt_rank,
                           mxu_dtype=jnp.bfloat16, chunk_len=None,
                           scratch_budget_bytes=8 * 1024 * 1024):
    """x: (B, L, D). Forward pass of SelectiveScan. Returns (B, L, D)."""
    del dt_rank  # dt projection is folded into the fused input weight
    B, L, D = x.shape
    N, K = state_dim, d_conv
    (Wx, Wz, Wdtin, WB, WC, Wdt, bdt, convw, A_log, Dp, Wout) = weights

    # Fold the thin (rank R) dt projection into one (D, D) matrix, then fuse
    # all input projections into a single MXU matmul.  WB is zero-padded so the
    # B and C slices start on 128-lane boundaries when D % 128 == 0.
    W_dtf = Wdtin.astype(jnp.float32) @ Wdt.astype(jnp.float32)       # (D, D)
    Np = -(-N // 128) * 128
    WB_pad = jnp.pad(WB, ((0, 0), (0, Np - N)))
    W_in = jnp.concatenate([Wx, Wz, W_dtf, WB_pad, WC], axis=1).astype(mxu_dtype)
    P = 3 * D + Np + N
    Wout_c = Wout.astype(mxu_dtype)
    A_log_t = jnp.asarray(A_log).T                                    # (N, D)

    if chunk_len is None:
        chunk_len = _choose_chunk_len(L, B, N, D, K, scratch_budget_bytes)
    Lc = chunk_len
    assert L % Lc == 0, f"chunk_len={Lc} must divide L={L}"
    num_chunks = L // Lc
    assert num_chunks == 1 or Lc >= K - 1, "chunk_len must be >= d_conv - 1"
    assert num_chunks == 1 or (Lc * B) % 8 == 0, "chunk rows must be a multiple of 8"
    Mc = Lc * B
    pad_rows = (K - 1) * B

    # Time-major flatten: row m = t*B + b.  The scan walks contiguous B-row
    # blocks, the causal conv is a row shift by B, and each L-chunk is a
    # contiguous (Mc, D) tile of rows (clean BlockSpec tiling).
    xt = jnp.swapaxes(x, 0, 1).reshape(L * B, D)

    kernel = functools.partial(
        selective_scan_kernel,
        chunk_len=Lc, batch=B, state_dim=N, d_conv=K, n_pad=Np)

    def const(shape):
        return pl.BlockSpec(shape, lambda i: tuple(0 for _ in shape))

    # Explicit VMEM budget for this tiling (scratch + double-buffered chunk IO
    # + resident weights), with headroom; keeps buffering alive on 64 MiB v7x.
    wbytes = jnp.finfo(mxu_dtype).bits // 8
    scratch_bytes = 4 * (B * N * D + (pad_rows + Mc) * D + 3 * Mc * N * D + Mc * D)
    weight_bytes = 2 * (D * P * wbytes + D * D * wbytes + (K * D + N * D + 2 * D) * 4)
    io_bytes = 2 * 2 * Mc * D * x.dtype.itemsize
    vmem_limit = int(1.5 * (scratch_bytes + weight_bytes + io_bytes)) + (4 << 20)
    vmem_limit = max(32 << 20, min(vmem_limit, 112 << 20))

    out_flat = pl.pallas_call(
        kernel,
        out_shape=jax.ShapeDtypeStruct((L * B, D), x.dtype),
        grid_spec=pltpu.PrefetchScalarGridSpec(
            num_scalar_prefetch=0,
            grid=(num_chunks,),
            in_specs=[
                pl.BlockSpec((Mc, D), lambda i: (i, 0)),   # x chunk (pipelined)
                const((D, P)),       # fused in-proj weight (resident)
                const((1, D)),       # dt_proj bias
                const((K, D)),       # conv weight
                const((N, D)),       # A_log^T
                const((1, D)),       # D parameter
                const((D, D)),       # out_proj weight
            ],
            out_specs=pl.BlockSpec((Mc, D), lambda i: (i, 0)),
            scratch_shapes=[
                pltpu.VMEM((B, N, D), jnp.float32),            # hidden state carry
                pltpu.VMEM((pad_rows + Mc, D), jnp.float32),   # conv halo + x_res
                pltpu.VMEM((Mc, N, D), jnp.float32),           # A_tilde
                pltpu.VMEM((Mc, N, D), jnp.float32),           # input term
                pltpu.VMEM((Mc, N, D), jnp.float32),           # C broadcast
                pltpu.VMEM((Mc, D), jnp.float32),              # y (pre-gate)
            ],
        ),
        compiler_params=pltpu.CompilerParams(
            dimension_semantics=("arbitrary",),
            vmem_limit_bytes=vmem_limit,
        ),
    )(xt, W_in, bdt, convw, A_log_t, Dp, Wout_c)

    return jnp.swapaxes(out_flat.reshape(L, B, D), 0, 1)


def reference_forward(x, weights, *, state_dim, d_conv, dt_rank):
    """Pure-JAX reference replicating the PyTorch forward semantics."""
    (Wx, Wz, Wdtin, WB, WC, Wdt, bdt, convw, A_log, Dp, Wout) = weights
    B, L, D = x.shape
    N, K, R = state_dim, d_conv, dt_rank

    x_res = x @ Wx
    z = x @ Wz
    dt_unproj = x @ Wdtin
    B_proj = x @ WB
    C_proj = x @ WC
    dt = _softplus(dt_unproj @ Wdt + bdt[0])

    # causal depthwise conv (PyTorch conv1d with padding=K-1, sliced to L)
    conv = jnp.zeros_like(x_res)
    for k in range(K):
        shift = K - 1 - k
        if shift == 0:
            shifted = x_res
        else:
            shifted = jnp.concatenate(
                [jnp.zeros((B, shift, D), x_res.dtype), x_res[:, :L - shift, :]],
                axis=1)
        conv = conv + shifted * convw[k][None, None, :]
    u = _silu(conv)

    A = -jnp.exp(A_log)                                      # (D, N)
    A_tilde = jnp.exp(dt[..., None] * A[None, None])         # (B, L, D, N)
    B_tilde = jnp.where(jnp.abs(A)[None, None] < 1e-8, dt[..., None],
                        (A_tilde - 1.0) / (A[None, None] + 1e-10))

    h = jnp.zeros((B, D, N), dtype=jnp.float32)
    ys = []
    for t in range(L):
        inp = B_tilde[:, t] * B_proj[:, t][:, None, :] * u[:, t][:, :, None]
        h = A_tilde[:, t] * h + inp
        ys.append(jnp.einsum('bn,bdn->bd', C_proj[:, t], h))
    y = jnp.stack(ys, axis=1)
    y = y + u * Dp[0][None, None]
    y = y * _silu(z)
    return y @ Wout


def init_weights(key, embed_dim, state_dim, d_conv, dt_rank):
    D, N, K, R = embed_dim, state_dim, d_conv, dt_rank
    ks = jax.random.split(key, 7)
    bound = 1.0 / math.sqrt(D)
    Wx = jax.random.uniform(ks[0], (D, D), jnp.float32, -bound, bound)
    Wz = jax.random.uniform(ks[1], (D, D), jnp.float32, -bound, bound)
    Wp = jax.random.uniform(ks[2], (D, R + 2 * N), jnp.float32, -bound, bound)
    Wdtin, WB, WC = Wp[:, :R], Wp[:, R:R + N], Wp[:, R + N:R + 2 * N]
    dt_std = R ** (-0.5)
    Wdt = jax.random.uniform(ks[3], (R, D), jnp.float32, -dt_std, dt_std)
    bdt = jnp.full((1, D), math.log(math.expm1(0.01)), jnp.float32)
    conv_bound = 1.0 / math.sqrt(1 * K)          # depthwise: fan_in = 1 * K
    convw = jax.random.uniform(ks[4], (K, D), jnp.float32, -conv_bound, conv_bound)
    A_log = jnp.tile(jnp.log(jnp.arange(1, N + 1, dtype=jnp.float32))[None, :], (D, 1))
    Dp = jnp.ones((1, D), jnp.float32)
    Wout = jax.random.uniform(ks[5], (D, D), jnp.float32, -bound, bound)
    return (Wx, Wz, Wdtin, WB, WC, Wdt, bdt, convw, A_log, Dp, Wout)


if __name__ == "__main__":
    B, L, D = 2, 8, 32
    N, K = 16, 4
    R = math.ceil(D / 16)   # dt_rank = 'auto' -> 2

    key = jax.random.PRNGKey(0)
    k_w, k_x = jax.random.split(key)
    weights = init_weights(k_w, D, N, K, R)
    x = jax.random.normal(k_x, (B, L, D), jnp.float32)

    ref = jax.block_until_ready(
        reference_forward(x, weights, state_dim=N, d_conv=K, dt_rank=R))

    # f32 MXU operands (single chunk): strict check against the reference.
    out = selective_scan_forward(x, weights, state_dim=N, d_conv=K, dt_rank=R,
                                 mxu_dtype=jnp.float32)
    out = jax.block_until_ready(out)
    if not jnp.allclose(out, ref, rtol=1e-3, atol=1e-3):
        max_err = float(jnp.max(jnp.abs(out - ref)))
        raise AssertionError(f"Pallas kernel (f32) mismatch, max_err={max_err}")

    # f32 with forced chunking: exercises the conv halo + hidden-state carry.
    B2, L2 = 2, 16
    x2 = jax.random.normal(jax.random.split(k_x)[0], (B2, L2, D), jnp.float32)
    ref2 = jax.block_until_ready(
        reference_forward(x2, weights, state_dim=N, d_conv=K, dt_rank=R))
    out2 = selective_scan_forward(x2, weights, state_dim=N, d_conv=K, dt_rank=R,
                                  mxu_dtype=jnp.float32, chunk_len=4)
    out2 = jax.block_until_ready(out2)
    if not jnp.allclose(out2, ref2, rtol=1e-3, atol=1e-3):
        max_err = float(jnp.max(jnp.abs(out2 - ref2)))
        raise AssertionError(f"Pallas kernel (chunked f32) mismatch, max_err={max_err}")

    # default bf16 MXU operands (f32 accumulation / elementwise): loose check.
    out_bf16 = selective_scan_forward(x, weights, state_dim=N, d_conv=K, dt_rank=R)
    out_bf16 = jax.block_until_ready(out_bf16)
    if not jnp.allclose(out_bf16, ref, rtol=1e-1, atol=1e-1):
        max_err = float(jnp.max(jnp.abs(out_bf16 - ref)))
        raise AssertionError(f"Pallas kernel (bf16 MXU) mismatch, max_err={max_err}")

    print("KERNEL_OK")
</pallas_src>

<mosaic_0001>
module attributes {stable_mosaic.version = 11 : i64} {
  func.func @selective_scan_kernel(%arg0: i32, %arg1: memref<16x32xf32, #tpu.memory_space<vmem>>, %arg2: memref<32x240xf32, #tpu.memory_space<vmem>>, %arg3: memref<1x32xf32, #tpu.memory_space<vmem>>, %arg4: memref<4x32xf32, #tpu.memory_space<vmem>>, %arg5: memref<16x32xf32, #tpu.memory_space<vmem>>, %arg6: memref<1x32xf32, #tpu.memory_space<vmem>>, %arg7: memref<32x32xf32, #tpu.memory_space<vmem>>, %arg8: memref<16x32xf32, #tpu.memory_space<vmem>>, %arg9: memref<2x16x32xf32, #tpu.memory_space<vmem>>, %arg10: memref<22x32xf32, #tpu.memory_space<vmem>>, %arg11: memref<16x16x32xf32, #tpu.memory_space<vmem>>, %arg12: memref<16x16x32xf32, #tpu.memory_space<vmem>>, %arg13: memref<16x16x32xf32, #tpu.memory_space<vmem>>, %arg14: memref<16x32xf32, #tpu.memory_space<vmem>>) attributes {dimension_semantics = [#tpu.dimension_semantics<arbitrary>], iteration_bounds = array<i64: 1>, scalar_prefetch = 0 : i64, scratch_operands = 6 : i64, tpu.core_type = #tpu.core_type<tc>, window_params = [{transform_indices = @transform_0, window_bounds = array<i64: 16, 32>}, {pipeline_mode = #tpu.pipeline_mode<synchronous>, transform_indices = @transform_1, window_bounds = array<i64: 32, 240>}, {pipeline_mode = #tpu.pipeline_mode<synchronous>, transform_indices = @transform_2, window_bounds = array<i64: 1, 32>}, {pipeline_mode = #tpu.pipeline_mode<synchronous>, transform_indices = @transform_3, window_bounds = array<i64: 4, 32>}, {pipeline_mode = #tpu.pipeline_mode<synchronous>, transform_indices = @transform_4, window_bounds = array<i64: 16, 32>}, {pipeline_mode = #tpu.pipeline_mode<synchronous>, transform_indices = @transform_5, window_bounds = array<i64: 1, 32>}, {pipeline_mode = #tpu.pipeline_mode<synchronous>, transform_indices = @transform_6, window_bounds = array<i64: 32, 32>}, {transform_indices = @transform_7, window_bounds = array<i64: 16, 32>}]} {
    %c0_i32 = arith.constant 0 : i32
    %0 = arith.cmpi eq, %arg0, %c0_i32 : i32
    %1 = arith.extui %0 : i1 to i32
    %c0_i32_0 = arith.constant 0 : i32
    %2 = arith.cmpi ne, %1, %c0_i32_0 : i32
    scf.if %2 {
      %cst_134 = arith.constant 0.000000e+00 : f32
      %239 = vector.broadcast %cst_134 : f32 to vector<2x16x32xf32>
      %c0_135 = arith.constant 0 : index
      %c0_136 = arith.constant 0 : index
      %c0_137 = arith.constant 0 : index
      %240 = vector.load %arg9[%c0_135, %c0_136, %c0_137] : memref<2x16x32xf32, #tpu.memory_space<vmem>>, vector<2x16x32xf32>
      tpu.vector_store %arg9[%c0_135, %c0_136, %c0_137], %239 {strides = array<i32>} : memref<2x16x32xf32, #tpu.memory_space<vmem>>, vector<2x16x32xf32>,
      %cst_138 = arith.constant 0.000000e+00 : f32
      %241 = vector.broadcast %cst_138 : f32 to vector<6x32xf32>
      %c0_139 = arith.constant 0 : index
      %c0_140 = arith.constant 0 : index
      %242 = vector.load %arg10[%c0_139, %c0_140] : memref<22x32xf32, #tpu.memory_space<vmem>>, vector<6x32xf32>
      tpu.vector_store %arg10[%c0_139, %c0_140], %241 {strides = array<i32>} : memref<22x32xf32, #tpu.memory_space<vmem>>, vector<6x32xf32>,
    } else {
    }
    %c0 = arith.constant 0 : index
    %c0_1 = arith.constant 0 : index
    %3 = vector.load %arg1[%c0, %c0_1] : memref<16x32xf32, #tpu.memory_space<vmem>>, vector<16x32xf32>
    %c0_2 = arith.constant 0 : index
    %c0_3 = arith.constant 0 : index
    %4 = vector.load %arg2[%c0_2, %c0_3] : memref<32x240xf32, #tpu.memory_space<vmem>>, vector<32x240xf32>
    %cst = arith.constant dense<0.000000e+00> : vector<16x240xf32>
    %5 = tpu.matmul %3, %4, %cst {dimension_numbers = #tpu.dot_dimension_numbers<[1], [0], [0], [1], [0, 0, 1, 1], [], []>} : vector<16x32xf32>, vector<32x240xf32>, vector<16x240xf32> -> vector<16x240xf32>
    %6 = vector.extract_strided_slice %5 {offsets = [0, 0], sizes = [16, 32], strides = [1, 1]} : vector<16x240xf32> to vector<16x32xf32>
    %7 = vector.extract_strided_slice %5 {offsets = [0, 32], sizes = [16, 32], strides = [1, 1]} : vector<16x240xf32> to vector<16x32xf32>
    %8 = vector.extract_strided_slice %5 {offsets = [0, 64], sizes = [16, 32], strides = [1, 1]} : vector<16x240xf32> to vector<16x32xf32>
    %c0_4 = arith.constant 0 : index
    %c0_5 = arith.constant 0 : index
    %9 = vector.load %arg3[%c0_4, %c0_5] : memref<1x32xf32, #tpu.memory_space<vmem>>, vector<1x32xf32>
    %10 = vector.broadcast %9 : vector<1x32xf32> to vector<16x32xf32>
    %11 = arith.addf %8, %10 : vector<16x32xf32>
    %cst_6 = arith.constant 2.000000e+01 : f32
    %12 = vector.broadcast %cst_6 : f32 to vector<16x32xf32>
    %13 = arith.cmpf ogt, %11, %12 : vector<16x32xf32>
    %cst_7 = arith.constant 2.000000e+01 : f32
    %14 = vector.broadcast %cst_7 : f32 to vector<16x32xf32>
    %15 = arith.minimumf %11, %14 : vector<16x32xf32>
    %16 = math.exp %15 : vector<16x32xf32>
    %17 = math.log1p %16 : vector<16x32xf32>
    %18 = arith.select %13, %11, %17 : vector<16x32xi1>, vector<16x32xf32>
    %19 = vector.extract_strided_slice %5 {offsets = [0, 96], sizes = [16, 16], strides = [1, 1]} : vector<16x240xf32> to vector<16x16xf32>
    %20 = vector.extract_strided_slice %5 {offsets = [0, 224], sizes = [16, 16], strides = [1, 1]} : vector<16x240xf32> to vector<16x16xf32>
    %c6 = arith.constant 6 : index
    %c0_8 = arith.constant 0 : index
    %21 = vector.load %arg10[%c6, %c0_8] : memref<22x32xf32, #tpu.memory_space<vmem>>, vector<16x32xf32>
    tpu.vector_store %arg10[%c6, %c0_8], %6 {strides = array<i32>} : memref<22x32xf32, #tpu.memory_space<vmem>>, vector<16x32xf32>,
    %c0_9 = arith.constant 0 : index
    %c0_10 = arith.constant 0 : index
    %22 = vector.load %arg4[%c0_9, %c0_10] : memref<4x32xf32, #tpu.memory_space<vmem>>, vector<4x32xf32>
    %cst_11 = arith.constant 0.000000e+00 : f32
    %23 = vector.broadcast %cst_11 : f32 to vector<16x32xf32>
    %c0_12 = arith.constant 0 : index
    %c0_13 = arith.constant 0 : index
    %24 = vector.load %arg10[%c0_12, %c0_13] : memref<22x32xf32, #tpu.memory_space<vmem>>, vector<16x32xf32>
    %25 = vector.extract_strided_slice %22 {offsets = [0, 0], sizes = [1, 32], strides = [1, 1]} : vector<4x32xf32> to vector<1x32xf32>
    %26 = vector.shape_cast %25 : vector<1x32xf32> to vector<32xf32>
    %27 = vector.shape_cast %26 : vector<32xf32> to vector<1x32xf32>
    %28 = vector.broadcast %27 : vector<1x32xf32> to vector<16x32xf32>
    %29 = arith.mulf %24, %28 : vector<16x32xf32>
    %30 = arith.addf %23, %29 : vector<16x32xf32>
    %c2 = arith.constant 2 : index
    %c0_14 = arith.constant 0 : index
    %31 = vector.load %arg10[%c2, %c0_14] : memref<22x32xf32, #tpu.memory_space<vmem>>, vector<16x32xf32>
    %32 = vector.extract_strided_slice %22 {offsets = [1, 0], sizes = [1, 32], strides = [1, 1]} : vector<4x32xf32> to vector<1x32xf32>
    %33 = vector.shape_cast %32 : vector<1x32xf32> to vector<32xf32>
    %34 = vector.shape_cast %33 : vector<32xf32> to vector<1x32xf32>
    %35 = vector.broadcast %34 : vector<1x32xf32> to vector<16x32xf32>
    %36 = arith.mulf %31, %35 : vector<16x32xf32>
    %37 = arith.addf %30, %36 : vector<16x32xf32>
    %c4 = arith.constant 4 : index
    %c0_15 = arith.constant 0 : index
    %38 = vector.load %arg10[%c4, %c0_15] : memref<22x32xf32, #tpu.memory_space<vmem>>, vector<16x32xf32>
    %39 = vector.extract_strided_slice %22 {offsets = [2, 0], sizes = [1, 32], strides = [1, 1]} : vector<4x32xf32> to vector<1x32xf32>
    %40 = vector.shape_cast %39 : vector<1x32xf32> to vector<32xf32>
    %41 = vector.shape_cast %40 : vector<32xf32> to vector<1x32xf32>
    %42 = vector.broadcast %41 : vector<1x32xf32> to vector<16x32xf32>
    %43 = arith.mulf %38, %42 : vector<16x32xf32>
    %44 = arith.addf %37, %43 : vector<16x32xf32>
    %c6_16 = arith.constant 6 : index
    %c0_17 = arith.constant 0 : index
    %45 = vector.load %arg10[%c6_16, %c0_17] : memref<22x32xf32, #tpu.memory_space<vmem>>, vector<16x32xf32>
    %46 = vector.extract_strided_slice %22 {offsets = [3, 0], sizes = [1, 32], strides = [1, 1]} : vector<4x32xf32> to vector<1x32xf32>
    %47 = vector.shape_cast %46 : vector<1x32xf32> to vector<32xf32>
    %48 = vector.shape_cast %47 : vector<32xf32> to vector<1x32xf32>
    %49 = vector.broadcast %48 : vector<1x32xf32> to vector<16x32xf32>
    %50 = arith.mulf %45, %49 : vector<16x32xf32>
    %51 = arith.addf %44, %50 : vector<16x32xf32>
    %cst_18 = arith.constant 0.000000e+00 : f32
    %52 = vector.broadcast %cst_18 : f32 to vector<16x32xf32>
    %53 = arith.subf %52, %51 : vector<16x32xf32>
    %54 = math.exp %53 : vector<16x32xf32>
    %cst_19 = arith.constant 1.000000e+00 : f32
    %55 = vector.broadcast %cst_19 : f32 to vector<16x32xf32>
    %56 = arith.addf %55, %54 : vector<16x32xf32>
    %cst_20 = arith.constant 1.000000e+00 : f32
    %57 = vector.broadcast %cst_20 : f32 to vector<16x32xf32>
    %58 = arith.divf %57, %56 : vector<16x32xf32>
    %59 = arith.mulf %51, %58 : vector<16x32xf32>
    %c1_i32 = arith.constant 1 : i32
    %60 = arith.addi %arg0, %c1_i32 : i32
    %c1_i32_21 = arith.constant 1 : i32
    %61 = arith.cmpi slt, %60, %c1_i32_21 : i32
    %62 = arith.extui %61 : i1 to i32
    %c0_i32_22 = arith.constant 0 : i32
    %63 = arith.cmpi ne, %62, %c0_i32_22 : i32
    scf.if %63 {
      %c16 = arith.constant 16 : index
      %c0_134 = arith.constant 0 : index
      %239 = vector.load %arg10[%c16, %c0_134] : memref<22x32xf32, #tpu.memory_space<vmem>>, vector<6x32xf32>
      %c0_135 = arith.constant 0 : index
      %c0_136 = arith.constant 0 : index
      %240 = vector.load %arg10[%c0_135, %c0_136] : memref<22x32xf32, #tpu.memory_space<vmem>>, vector<6x32xf32>
      tpu.vector_store %arg10[%c0_135, %c0_136], %239 {strides = array<i32>} : memref<22x32xf32, #tpu.memory_space<vmem>>, vector<6x32xf32>,
    } else {
    }
    %c0_23 = arith.constant 0 : index
    %c0_24 = arith.constant 0 : index
    %64 = vector.load %arg5[%c0_23, %c0_24] : memref<16x32xf32, #tpu.memory_space<vmem>>, vector<16x32xf32>
    %65 = math.exp %64 : vector<16x32xf32>
    %cst_25 = arith.constant 0.000000e+00 : f32
    %66 = vector.broadcast %cst_25 : f32 to vector<16x32xf32>
    %67 = arith.subf %66, %65 : vector<16x32xf32>
    %68 = math.absf %67 : vector<16x32xf32>
    %cst_26 = arith.constant 9.99999993E-9 : f32
    %69 = vector.broadcast %cst_26 : f32 to vector<16x32xf32>
    %70 = arith.cmpf olt, %68, %69 : vector<16x32xf32>
    %cst_27 = arith.constant 1.000000e-10 : f32
    %71 = vector.broadcast %cst_27 : f32 to vector<16x32xf32>
    %72 = arith.addf %67, %71 : vector<16x32xf32>
    %cst_28 = arith.constant 1.000000e+00 : f32
    %73 = vector.broadcast %cst_28 : f32 to vector<16x32xf32>
    %74 = arith.divf %73, %72 : vector<16x32xf32>
    %cst_29 = arith.constant 0.000000e+00 : f32
    %75 = vector.broadcast %cst_29 : f32 to vector<16x32xf32>
    %76 = arith.select %70, %75, %74 : vector<16x32xi1>, vector<16x32xf32>
    %cst_30 = arith.constant 1.000000e+00 : f32
    %cst_31 = arith.constant 0.000000e+00 : f32
    %77 = vector.broadcast %cst_30 : f32 to vector<16x32xf32>
    %78 = vector.broadcast %cst_31 : f32 to vector<16x32xf32>
    %79 = arith.select %70, %77, %78 : vector<16x32xi1>, vector<16x32xf32>
    %80 = vector.shape_cast %18 : vector<16x32xf32> to vector<16x1x32xf32>
    %81 = vector.shape_cast %67 : vector<16x32xf32> to vector<1x16x32xf32>
    %82 = vector.broadcast %80 : vector<16x1x32xf32> to vector<16x16x32xf32>
    %83 = vector.broadcast %81 : vector<1x16x32xf32> to vector<16x16x32xf32>
    %84 = arith.mulf %82, %83 : vector<16x16x32xf32>
    %85 = math.exp %84 : vector<16x16x32xf32>
    %cst_32 = arith.constant 1.000000e+00 : f32
    %86 = vector.broadcast %cst_32 : f32 to vector<16x16x32xf32>
    %87 = arith.subf %85, %86 : vector<16x16x32xf32>
    %88 = vector.shape_cast %76 : vector<16x32xf32> to vector<1x16x32xf32>
    %89 = vector.broadcast %88 : vector<1x16x32xf32> to vector<16x16x32xf32>
    %90 = arith.mulf %87, %89 : vector<16x16x32xf32>
    %91 = vector.shape_cast %79 : vector<16x32xf32> to vector<1x16x32xf32>
    %92 = vector.broadcast %91 : vector<1x16x32xf32> to vector<16x16x32xf32>
    %93 = vector.broadcast %80 : vector<16x1x32xf32> to vector<16x16x32xf32>
    %94 = arith.mulf %92, %93 : vector<16x16x32xf32>
    %95 = arith.addf %90, %94 : vector<16x16x32xf32>
    %c0_33 = arith.constant 0 : index
    %c0_34 = arith.constant 0 : index
    %c0_35 = arith.constant 0 : index
    %96 = vector.load %arg11[%c0_33, %c0_34, %c0_35] : memref<16x16x32xf32, #tpu.memory_space<vmem>>, vector<16x16x32xf32>
    tpu.vector_store %arg11[%c0_33, %c0_34, %c0_35], %85 {strides = array<i32>} : memref<16x16x32xf32, #tpu.memory_space<vmem>>, vector<16x16x32xf32>,
    %97 = vector.shape_cast %19 : vector<16x16xf32> to vector<16x16x1xf32>
    %98 = vector.broadcast %97 : vector<16x16x1xf32> to vector<16x16x32xf32>
    %99 = arith.mulf %95, %98 : vector<16x16x32xf32>
    %100 = vector.shape_cast %59 : vector<16x32xf32> to vector<16x1x32xf32>
    %101 = vector.broadcast %100 : vector<16x1x32xf32> to vector<16x16x32xf32>
    %102 = arith.mulf %99, %101 : vector<16x16x32xf32>
    %c0_36 = arith.constant 0 : index
    %c0_37 = arith.constant 0 : index
    %c0_38 = arith.constant 0 : index
    %103 = vector.load %arg12[%c0_36, %c0_37, %c0_38] : memref<16x16x32xf32, #tpu.memory_space<vmem>>, vector<16x16x32xf32>
    tpu.vector_store %arg12[%c0_36, %c0_37, %c0_38], %102 {strides = array<i32>} : memref<16x16x32xf32, #tpu.memory_space<vmem>>, vector<16x16x32xf32>,
    %104 = vector.shape_cast %20 : vector<16x16xf32> to vector<16x16x1xf32>
    %105 = vector.shape_cast %104 : vector<16x16x1xf32> to vector<16x16x1xf32>
    %106 = vector.broadcast %105 : vector<16x16x1xf32> to vector<16x16x32xf32>
    %c0_39 = arith.constant 0 : index
    %c0_40 = arith.constant 0 : index
    %c0_41 = arith.constant 0 : index
    %107 = vector.load %arg13[%c0_39, %c0_40, %c0_41] : memref<16x16x32xf32, #tpu.memory_space<vmem>>, vector<16x16x32xf32>
    tpu.vector_store %arg13[%c0_39, %c0_40, %c0_41], %106 {strides = array<i32>} : memref<16x16x32xf32, #tpu.memory_space<vmem>>, vector<16x16x32xf32>,
    %c0_42 = arith.constant 0 : index
    %c0_43 = arith.constant 0 : index
    %c0_44 = arith.constant 0 : index
    %108 = vector.load %arg9[%c0_42, %c0_43, %c0_44] : memref<2x16x32xf32, #tpu.memory_space<vmem>>, vector<2x16x32xf32>
    %c0_i32_45 = arith.constant 0 : i32
    %c2_i32 = arith.constant 2 : i32
    %109 = arith.muli %c0_i32_45, %c2_i32 : i32
    %110 = tpu.assume_multiple %109, 2 : i32
    %111 = arith.index_cast %110 : i32 to index
    %c0_46 = arith.constant 0 : index
    %c0_47 = arith.constant 0 : index
    %112 = vector.load %arg11[%111, %c0_46, %c0_47] : memref<16x16x32xf32, #tpu.memory_space<vmem>>, vector<2x16x32xf32>
    %113 = arith.mulf %112, %108 : vector<2x16x32xf32>
    %114 = arith.index_cast %110 : i32 to index
    %c0_48 = arith.constant 0 : index
    %c0_49 = arith.constant 0 : index
    %115 = vector.load %arg12[%114, %c0_48, %c0_49] : memref<16x16x32xf32, #tpu.memory_space<vmem>>, vector<2x16x32xf32>
    %116 = arith.addf %113, %115 : vector<2x16x32xf32>
    %117 = arith.index_cast %110 : i32 to index
    %c0_50 = arith.constant 0 : index
    %c0_51 = arith.constant 0 : index
    %118 = vector.load %arg13[%117, %c0_50, %c0_51] : memref<16x16x32xf32, #tpu.memory_space<vmem>>, vector<2x16x32xf32>
    %119 = arith.mulf %118, %116 : vector<2x16x32xf32>
    %cst_52 = arith.constant dense<0.000000e+00> : vector<2x32xf32>
    %120 = vector.multi_reduction <add>, %119, %cst_52 [1] : vector<2x16x32xf32> to vector<2x32xf32>
    %121 = arith.index_cast %110 : i32 to index
    %c0_53 = arith.constant 0 : index
    %122 = vector.load %arg14[%121, %c0_53] : memref<16x32xf32, #tpu.memory_space<vmem>>, vector<2x32xf32>
    tpu.vector_store %arg14[%121, %c0_53], %120 {strides = array<i32>} : memref<16x32xf32, #tpu.memory_space<vmem>>, vector<2x32xf32>,
    %c1_i32_54 = arith.constant 1 : i32
    %c2_i32_55 = arith.constant 2 : i32
    %123 = arith.muli %c1_i32_54, %c2_i32_55 : i32
    %124 = tpu.assume_multiple %123, 2 : i32
    %125 = arith.index_cast %124 : i32 to index
    %c0_56 = arith.constant 0 : index
    %c0_57 = arith.constant 0 : index
    %126 = vector.load %arg11[%125, %c0_56, %c0_57] : memref<16x16x32xf32, #tpu.memory_space<vmem>>, vector<2x16x32xf32>
    %127 = arith.mulf %126, %116 : vector<2x16x32xf32>
    %128 = arith.index_cast %124 : i32 to index
    %c0_58 = arith.constant 0 : index
    %c0_59 = arith.constant 0 : index
    %129 = vector.load %arg12[%128, %c0_58, %c0_59] : memref<16x16x32xf32, #tpu.memory_space<vmem>>, vector<2x16x32xf32>
    %130 = arith.addf %127, %129 : vector<2x16x32xf32>
    %131 = arith.index_cast %124 : i32 to index
    %c0_60 = arith.constant 0 : index
    %c0_61 = arith.constant 0 : index
    %132 = vector.load %arg13[%131, %c0_60, %c0_61] : memref<16x16x32xf32, #tpu.memory_space<vmem>>, vector<2x16x32xf32>
    %133 = arith.mulf %132, %130 : vector<2x16x32xf32>
    %cst_62 = arith.constant dense<0.000000e+00> : vector<2x32xf32>
    %134 = vector.multi_reduction <add>, %133, %cst_62 [1] : vector<2x16x32xf32> to vector<2x32xf32>
    %135 = arith.index_cast %124 : i32 to index
    %c0_63 = arith.constant 0 : index
    %136 = vector.load %arg14[%135, %c0_63] : memref<16x32xf32, #tpu.memory_space<vmem>>, vector<2x32xf32>
    tpu.vector_store %arg14[%135, %c0_63], %134 {strides = array<i32>} : memref<16x32xf32, #tpu.memory_space<vmem>>, vector<2x32xf32>,
    %c2_i32_64 = arith.constant 2 : i32
    %c2_i32_65 = arith.constant 2 : i32
    %137 = arith.muli %c2_i32_64, %c2_i32_65 : i32
    %138 = tpu.assume_multiple %137, 2 : i32
    %139 = arith.index_cast %138 : i32 to index
    %c0_66 = arith.constant 0 : index
    %c0_67 = arith.constant 0 : index
    %140 = vector.load %arg11[%139, %c0_66, %c0_67] : memref<16x16x32xf32, #tpu.memory_space<vmem>>, vector<2x16x32xf32>
    %141 = arith.mulf %140, %130 : vector<2x16x32xf32>
    %142 = arith.index_cast %138 : i32 to index
    %c0_68 = arith.constant 0 : index
    %c0_69 = arith.constant 0 : index
    %143 = vector.load %arg12[%142, %c0_68, %c0_69] : memref<16x16x32xf32, #tpu.memory_space<vmem>>, vector<2x16x32xf32>
    %144 = arith.addf %141, %143 : vector<2x16x32xf32>
    %145 = arith.index_cast %138 : i32 to index
    %c0_70 = arith.constant 0 : index
    %c0_71 = arith.constant 0 : index
    %146 = vector.load %arg13[%145, %c0_70, %c0_71] : memref<16x16x32xf32, #tpu.memory_space<vmem>>, vector<2x16x32xf32>
    %147 = arith.mulf %146, %144 : vector<2x16x32xf32>
    %cst_72 = arith.constant dense<0.000000e+00> : vector<2x32xf32>
    %148 = vector.multi_reduction <add>, %147, %cst_72 [1] : vector<2x16x32xf32> to vector<2x32xf32>
    %149 = arith.index_cast %138 : i32 to index
    %c0_73 = arith.constant 0 : index
    %150 = vector.load %arg14[%149, %c0_73] : memref<16x32xf32, #tpu.memory_space<vmem>>, vector<2x32xf32>
    tpu.vector_store %arg14[%149, %c0_73], %148 {strides = array<i32>} : memref<16x32xf32, #tpu.memory_space<vmem>>, vector<2x32xf32>,
    %c3_i32 = arith.constant 3 : i32
    %c2_i32_74 = arith.constant 2 : i32
    %151 = arith.muli %c3_i32, %c2_i32_74 : i32
    %152 = tpu.assume_multiple %151, 2 : i32
    %153 = arith.index_cast %152 : i32 to index
    %c0_75 = arith.constant 0 : index
    %c0_76 = arith.constant 0 : index
    %154 = vector.load %arg11[%153, %c0_75, %c0_76] : memref<16x16x32xf32, #tpu.memory_space<vmem>>, vector<2x16x32xf32>
    %155 = arith.mulf %154, %144 : vector<2x16x32xf32>
    %156 = arith.index_cast %152 : i32 to index
    %c0_77 = arith.constant 0 : index
    %c0_78 = arith.constant 0 : index
    %157 = vector.load %arg12[%156, %c0_77, %c0_78] : memref<16x16x32xf32, #tpu.memory_space<vmem>>, vector<2x16x32xf32>
    %158 = arith.addf %155, %157 : vector<2x16x32xf32>
    %159 = arith.index_cast %152 : i32 to index
    %c0_79 = arith.constant 0 : index
    %c0_80 = arith.constant 0 : index
    %160 = vector.load %arg13[%159, %c0_79, %c0_80] : memref<16x16x32xf32, #tpu.memory_space<vmem>>, vector<2x16x32xf32>
    %161 = arith.mulf %160, %158 : vector<2x16x32xf32>
    %cst_81 = arith.constant dense<0.000000e+00> : vector<2x32xf32>
    %162 = vector.multi_reduction <add>, %161, %cst_81 [1] : vector<2x16x32xf32> to vector<2x32xf32>
    %163 = arith.index_cast %152 : i32 to index
    %c0_82 = arith.constant 0 : index
    %164 = vector.load %arg14[%163, %c0_82] : memref<16x32xf32, #tpu.memory_space<vmem>>, vector<2x32xf32>
    tpu.vector_store %arg14[%163, %c0_82], %162 {strides = array<i32>} : memref<16x32xf32, #tpu.memory_space<vmem>>, vector<2x32xf32>,
    %c4_i32 = arith.constant 4 : i32
    %c2_i32_83 = arith.constant 2 : i32
    %165 = arith.muli %c4_i32, %c2_i32_83 : i32
    %166 = tpu.assume_multiple %165, 2 : i32
    %167 = arith.index_cast %166 : i32 to index
    %c0_84 = arith.constant 0 : index
    %c0_85 = arith.constant 0 : index
    %168 = vector.load %arg11[%167, %c0_84, %c0_85] : memref<16x16x32xf32, #tpu.memory_space<vmem>>, vector<2x16x32xf32>
    %169 = arith.mulf %168, %158 : vector<2x16x32xf32>
    %170 = arith.index_cast %166 : i32 to index
    %c0_86 = arith.constant 0 : index
    %c0_87 = arith.constant 0 : index
    %171 = vector.load %arg12[%170, %c0_86, %c0_87] : memref<16x16x32xf32, #tpu.memory_space<vmem>>, vector<2x16x32xf32>
    %172 = arith.addf %169, %171 : vector<2x16x32xf32>
    %173 = arith.index_cast %166 : i32 to index
    %c0_88 = arith.constant 0 : index
    %c0_89 = arith.constant 0 : index
    %174 = vector.load %arg13[%173, %c0_88, %c0_89] : memref<16x16x32xf32, #tpu.memory_space<vmem>>, vector<2x16x32xf32>
    %175 = arith.mulf %174, %172 : vector<2x16x32xf32>
    %cst_90 = arith.constant dense<0.000000e+00> : vector<2x32xf32>
    %176 = vector.multi_reduction <add>, %175, %cst_90 [1] : vector<2x16x32xf32> to vector<2x32xf32>
    %177 = arith.index_cast %166 : i32 to index
    %c0_91 = arith.constant 0 : index
    %178 = vector.load %arg14[%177, %c0_91] : memref<16x32xf32, #tpu.memory_space<vmem>>, vector<2x32xf32>
    tpu.vector_store %arg14[%177, %c0_91], %176 {strides = array<i32>} : memref<16x32xf32, #tpu.memory_space<vmem>>, vector<2x32xf32>,
    %c5_i32 = arith.constant 5 : i32
    %c2_i32_92 = arith.constant 2 : i32
    %179 = arith.muli %c5_i32, %c2_i32_92 : i32
    %180 = tpu.assume_multiple %179, 2 : i32
    %181 = arith.index_cast %180 : i32 to index
    %c0_93 = arith.constant 0 : index
    %c0_94 = arith.constant 0 : index
    %182 = vector.load %arg11[%181, %c0_93, %c0_94] : memref<16x16x32xf32, #tpu.memory_space<vmem>>, vector<2x16x32xf32>
    %183 = arith.mulf %182, %172 : vector<2x16x32xf32>
    %184 = arith.index_cast %180 : i32 to index
    %c0_95 = arith.constant 0 : index
    %c0_96 = arith.constant 0 : index
    %185 = vector.load %arg12[%184, %c0_95, %c0_96] : memref<16x16x32xf32, #tpu.memory_space<vmem>>, vector<2x16x32xf32>
    %186 = arith.addf %183, %185 : vector<2x16x32xf32>
    %187 = arith.index_cast %180 : i32 to index
    %c0_97 = arith.constant 0 : index
    %c0_98 = arith.constant 0 : index
    %188 = vector.load %arg13[%187, %c0_97, %c0_98] : memref<16x16x32xf32, #tpu.memory_space<vmem>>, vector<2x16x32xf32>
    %189 = arith.mulf %188, %186 : vector<2x16x32xf32>
    %cst_99 = arith.constant dense<0.000000e+00> : vector<2x32xf32>
    %190 = vector.multi_reduction <add>, %189, %cst_99 [1] : vector<2x16x32xf32> to vector<2x32xf32>
    %191 = arith.index_cast %180 : i32 to index
    %c0_100 = arith.constant 0 : index
    %192 = vector.load %arg14[%191, %c0_100] : memref<16x32xf32, #tpu.memory_space<vmem>>, vector<2x32xf32>
    tpu.vector_store %arg14[%191, %c0_100], %190 {strides = array<i32>} : memref<16x32xf32, #tpu.memory_space<vmem>>, vector<2x32xf32>,
    %c6_i32 = arith.constant 6 : i32
    %c2_i32_101 = arith.constant 2 : i32
    %193 = arith.muli %c6_i32, %c2_i32_101 : i32
    %194 = tpu.assume_multiple %193, 2 : i32
    %195 = arith.index_cast %194 : i32 to index
    %c0_102 = arith.constant 0 : index
    %c0_103 = arith.constant 0 : index
    %196 = vector.load %arg11[%195, %c0_102, %c0_103] : memref<16x16x32xf32, #tpu.memory_space<vmem>>, vector<2x16x32xf32>
    %197 = arith.mulf %196, %186 : vector<2x16x32xf32>
    %198 = arith.index_cast %194 : i32 to index
    %c0_104 = arith.constant 0 : index
    %c0_105 = arith.constant 0 : index
    %199 = vector.load %arg12[%198, %c0_104, %c0_105] : memref<16x16x32xf32, #tpu.memory_space<vmem>>, vector<2x16x32xf32>
    %200 = arith.addf %197, %199 : vector<2x16x32xf32>
    %201 = arith.index_cast %194 : i32 to index
    %c0_106 = arith.constant 0 : index
    %c0_107 = arith.constant 0 : index
    %202 = vector.load %arg13[%201, %c0_106, %c0_107] : memref<16x16x32xf32, #tpu.memory_space<vmem>>, vector<2x16x32xf32>
    %203 = arith.mulf %202, %200 : vector<2x16x32xf32>
    %cst_108 = arith.constant dense<0.000000e+00> : vector<2x32xf32>
    %204 = vector.multi_reduction <add>, %203, %cst_108 [1] : vector<2x16x32xf32> to vector<2x32xf32>
    %205 = arith.index_cast %194 : i32 to index
    %c0_109 = arith.constant 0 : index
    %206 = vector.load %arg14[%205, %c0_109] : memref<16x32xf32, #tpu.memory_space<vmem>>, vector<2x32xf32>
    tpu.vector_store %arg14[%205, %c0_109], %204 {strides = array<i32>} : memref<16x32xf32, #tpu.memory_space<vmem>>, vector<2x32xf32>,
    %c7_i32 = arith.constant 7 : i32
    %c2_i32_110 = arith.constant 2 : i32
    %207 = arith.muli %c7_i32, %c2_i32_110 : i32
    %208 = tpu.assume_multiple %207, 2 : i32
    %209 = arith.index_cast %208 : i32 to index
    %c0_111 = arith.constant 0 : index
    %c0_112 = arith.constant 0 : index
    %210 = vector.load %arg11[%209, %c0_111, %c0_112] : memref<16x16x32xf32, #tpu.memory_space<vmem>>, vector<2x16x32xf32>
    %211 = arith.mulf %210, %200 : vector<2x16x32xf32>
    %212 = arith.index_cast %208 : i32 to index
    %c0_113 = arith.constant 0 : index
    %c0_114 = arith.constant 0 : index
    %213 = vector.load %arg12[%212, %c0_113, %c0_114] : memref<16x16x32xf32, #tpu.memory_space<vmem>>, vector<2x16x32xf32>
    %214 = arith.addf %211, %213 : vector<2x16x32xf32>
    %215 = arith.index_cast %208 : i32 to index
    %c0_115 = arith.constant 0 : index
    %c0_116 = arith.constant 0 : index
    %216 = vector.load %arg13[%215, %c0_115, %c0_116] : memref<16x16x32xf32, #tpu.memory_space<vmem>>, vector<2x16x32xf32>
    %217 = arith.mulf %216, %214 : vector<2x16x32xf32>
    %cst_117 = arith.constant dense<0.000000e+00> : vector<2x32xf32>
    %218 = vector.multi_reduction <add>, %217, %cst_117 [1] : vector<2x16x32xf32> to vector<2x32xf32>
    %219 = arith.index_cast %208 : i32 to index
    %c0_118 = arith.constant 0 : index
    %220 = vector.load %arg14[%219, %c0_118] : memref<16x32xf32, #tpu.memory_space<vmem>>, vector<2x32xf32>
    tpu.vector_store %arg14[%219, %c0_118], %218 {strides = array<i32>} : memref<16x32xf32, #tpu.memory_space<vmem>>, vector<2x32xf32>,
    %c8_i32 = arith.constant 8 : i32
    %c0_119 = arith.constant 0 : index
    %c0_120 = arith.constant 0 : index
    %c0_121 = arith.constant 0 : index
    %221 = vector.load %arg9[%c0_119, %c0_120, %c0_121] : memref<2x16x32xf32, #tpu.memory_space<vmem>>, vector<2x16x32xf32>
    tpu.vector_store %arg9[%c0_119, %c0_120, %c0_121], %214 {strides = array<i32>} : memref<2x16x32xf32, #tpu.memory_space<vmem>>, vector<2x16x32xf32>,
    %c0_122 = arith.constant 0 : index
    %c0_123 = arith.constant 0 : index
    %222 = vector.load %arg14[%c0_122, %c0_123] : memref<16x32xf32, #tpu.memory_space<vmem>>, vector<16x32xf32>
    %c0_124 = arith.constant 0 : index
    %c0_125 = arith.constant 0 : index
    %223 = vector.load %arg6[%c0_124, %c0_125] : memref<1x32xf32, #tpu.memory_space<vmem>>, vector<1x32xf32>
    %224 = vector.broadcast %223 : vector<1x32xf32> to vector<16x32xf32>
    %225 = arith.mulf %59, %224 : vector<16x32xf32>
    %226 = arith.addf %222, %225 : vector<16x32xf32>
    %cst_126 = arith.constant 0.000000e+00 : f32
    %227 = vector.broadcast %cst_126 : f32 to vector<16x32xf32>
    %228 = arith.subf %227, %7 : vector<16x32xf32>
    %229 = math.exp %228 : vector<16x32xf32>
    %cst_127 = arith.constant 1.000000e+00 : f32
    %230 = vector.broadcast %cst_127 : f32 to vector<16x32xf32>
    %231 = arith.addf %230, %229 : vector<16x32xf32>
    %cst_128 = arith.constant 1.000000e+00 : f32
    %232 = vector.broadcast %cst_128 : f32 to vector<16x32xf32>
    %233 = arith.divf %232, %231 : vector<16x32xf32>
    %234 = arith.mulf %7, %233 : vector<16x32xf32>
    %235 = arith.mulf %226, %234 : vector<16x32xf32>
    %c0_129 = arith.constant 0 : index
    %c0_130 = arith.constant 0 : index
    %236 = vector.load %arg7[%c0_129, %c0_130] : memref<32x32xf32, #tpu.memory_space<vmem>>, vector<32x32xf32>
    %cst_131 = arith.constant dense<0.000000e+00> : vector<16x32xf32>
    %237 = tpu.matmul %235, %236, %cst_131 {dimension_numbers = #tpu.dot_dimension_numbers<[1], [0], [0], [1], [0, 0, 1, 1], [], []>} : vector<16x32xf32>, vector<32x32xf32>, vector<16x32xf32> -> vector<16x32xf32>
    %c0_132 = arith.constant 0 : index
    %c0_133 = arith.constant 0 : index
    %238 = vector.load %arg8[%c0_132, %c0_133] : memref<16x32xf32, #tpu.memory_space<vmem>>, vector<16x32xf32>
    tpu.vector_store %arg8[%c0_132, %c0_133], %237 {strides = array<i32>} : memref<16x32xf32, #tpu.memory_space<vmem>>, vector<16x32xf32>,
    return
  }
  func.func @transform_0(%arg0: i32) -> (i32, i32) {
    %c0_i32 = arith.constant 0 : i32
    %c0_i32_0 = arith.constant 0 : i32
    return %arg0, %c0_i32 : i32, i32
  }
  func.func @transform_1(%arg0: i32) -> (i32, i32) {
    %c0_i32 = arith.constant 0 : i32
    %c0_i32_0 = arith.constant 0 : i32
    %c0_i32_1 = arith.constant 0 : i32
    return %c0_i32, %c0_i32_0 : i32, i32
  }
  func.func @transform_2(%arg0: i32) -> (i32, i32) {
    %c0_i32 = arith.constant 0 : i32
    %c0_i32_0 = arith.constant 0 : i32
    %c0_i32_1 = arith.constant 0 : i32
    return %c0_i32, %c0_i32_0 : i32, i32
  }
  func.func @transform_3(%arg0: i32) -> (i32, i32) {
    %c0_i32 = arith.constant 0 : i32
    %c0_i32_0 = arith.constant 0 : i32
    %c0_i32_1 = arith.constant 0 : i32
    return %c0_i32, %c0_i32_0 : i32, i32
  }
  func.func @transform_4(%arg0: i32) -> (i32, i32) {
    %c0_i32 = arith.constant 0 : i32
    %c0_i32_0 = arith.constant 0 : i32
    %c0_i32_1 = arith.constant 0 : i32
    return %c0_i32, %c0_i32_0 : i32, i32
  }
  func.func @transform_5(%arg0: i32) -> (i32, i32) {
    %c0_i32 = arith.constant 0 : i32
    %c0_i32_0 = arith.constant 0 : i32
    %c0_i32_1 = arith.constant 0 : i32
    return %c0_i32, %c0_i32_0 : i32, i32
  }
  func.func @transform_6(%arg0: i32) -> (i32, i32) {
    %c0_i32 = arith.constant 0 : i32
    %c0_i32_0 = arith.constant 0 : i32
    %c0_i32_1 = arith.constant 0 : i32
    return %c0_i32, %c0_i32_0 : i32, i32
  }
  func.func @transform_7(%arg0: i32) -> (i32, i32) {
    %c0_i32 = arith.constant 0 : i32
    %c0_i32_0 = arith.constant 0 : i32
    return %arg0, %c0_i32 : i32, i32
  }
}

</mosaic_0001>

<llo_original>
// kernel: tpu_custom_call.1
$region0: #{tpu_custom_call.1}
  #allocation0 [shape = 'u32[]', space=smem, size = 0x4, offset = 0x4, fixed_abs, tag = 'smem constant byte address 0x4 - core index']
  #allocation1 [shape = 'u32[144,128]{1,0:T(1,128)}', space=vmem, size = 0x12000, scoped, tag = 'internal scratch']
  #allocation2 [shape = 'f32[2,16,32]{2,1,0:T(8,128)}', space=vmem, size = 0x4000, scoped, tag = 'scratch operand']
  #allocation3 [shape = 'f32[22,32]{1,0:T(8,128)}', space=vmem, size = 0x3000, scoped, tag = 'scratch operand']
  #allocation4 [shape = 'f32[16,16,32]{2,1,0:T(8,128)}', space=vmem, size = 0x20000, scoped, tag = 'scratch operand']
  #allocation5 [shape = 'f32[16,16,32]{2,1,0:T(8,128)}', space=vmem, size = 0x20000, scoped, tag = 'scratch operand']
  #allocation6 [shape = 'f32[16,16,32]{2,1,0:T(8,128)}', space=vmem, size = 0x20000, scoped, tag = 'scratch operand']
  #allocation7 [shape = 'f32[16,32]{1,0:T(8,128)}', space=vmem, size = 0x2000, scoped, tag = 'scratch operand']
  %s0 = inlined_call_operand.hbm [shape: f32[16,32], index: 0, kind: input, shape index: {}]
  %s1 = inlined_call_operand.hbm [shape: f32[32,240], index: 1, kind: input, shape index: {}]
  %s2 = inlined_call_operand.vmem [shape: f32[1,32], index: 2, kind: input, shape index: {}]
  %s3 = inlined_call_operand.vmem [shape: f32[4,32], index: 3, kind: input, shape index: {}]
  %s4 = inlined_call_operand.hbm [shape: f32[16,32], index: 4, kind: input, shape index: {}]
  %s5 = inlined_call_operand.vmem [shape: f32[1,32], index: 5, kind: input, shape index: {}]
  %s6 = inlined_call_operand.hbm [shape: f32[32,32], index: 6, kind: input, shape index: {}]
  %s7 = inlined_call_operand.hbm [shape: f32[16,32], index: 7, kind: output, shape index: {}]
  %s8 = sld [smem:[#allocation0]]
  $region62: #{tpu_custom_call.1} parent=0
    _
  %s10 = ssub.s32 1, %s8
  %s11 = scalar_select 0, %s10, %s8
  $region1: #{tpu_custom_call.1} parent=0
    #allocation8 [shape = 'u8[8192]{0}', space=vmem, size = 0x2000, scoped, tag = 'input window, operand 0, single buffered']
    #allocation9 [shape = 's32[1]{0}', space=sflag, size = 0x4, scoped, tag = 'scoped memory for tpu_custom_call.1']
    #allocation10 [shape = 's32[1]{0}', space=sflag, size = 0x4, scoped, tag = 'scoped memory for tpu_custom_call.1']
    #allocation11 [shape = 'u8[32768]{0}', space=vmem, size = 0x8000, scoped, tag = 'input window, operand 1, single buffered']
    #allocation12 [shape = 's32[1]{0}', space=sflag, size = 0x4, scoped, tag = 'scoped memory for tpu_custom_call.1']
    #allocation13 [shape = 'u8[8192]{0}', space=vmem, size = 0x2000, scoped, tag = 'input window, operand 4, single buffered']
    #allocation14 [shape = 'u8[16384]{0}', space=vmem, size = 0x4000, scoped, tag = 'input window, operand 6, single buffered']
    #allocation15 [shape = 's32[1]{0}', space=sflag, size = 0x4, scoped, tag = 'scoped memory for tpu_custom_call.1']
    #allocation16 [shape = 'u8[8192]{0}', space=vmem, size = 0x2000, scoped, tag = 'output window, operand 0, single buffered']
    %12 = vsyncpa [#allocation9], 0
    %13 = vsyncpa [#allocation12], 0
    %14 = vsyncpa [#allocation15], 0
    %15 = vsyncpa [#allocation10], 0
    // Predicated region
    $region2: #{tpu_custom_call.1} parent=1 // pred_check
      _
    $region3: #{tpu_custom_call.1} parent=1 // pred_check_branch
      %17 = sbr.rel (0) target = $region5
    $region4: #{tpu_custom_call.1} parent=1 // pred_region
      %s19 = ssub.s32 256, 256
      %20 = vsyncadd [#allocation9], %s19
      %s21 = sshll.u32 [#allocation8], 4
      %s22 = int_to_ptr.vmem [resolvable:$true] %s21
      %27 = dma.hbm_to_vmem [thread:$0]  %s0, 256, %s22, [#allocation9], 128, 128, 8
    $region5: #{tpu_custom_call.1} parent=1 // pred_fallthru
      _
    // Predicated region
    $region6: #{tpu_custom_call.1} parent=1 // pred_check
      _
    $region7: #{tpu_custom_call.1} parent=1 // pred_check_branch
      %29 = sbr.rel (0) target = $region9
    $region8: #{tpu_custom_call.1} parent=1 // pred_region
      %s31 = ssub.s32 1024, 1024
      %32 = vsyncadd [#allocation12], %s31
      %s33 = sshll.u32 [#allocation11], 4
      %s34 = int_to_ptr.vmem [resolvable:$true] %s33
      %39 = dma.hbm_to_vmem [thread:$0]  %s1, 1024, %s34, [#allocation12], 256, 256, 16
    $region9: #{tpu_custom_call.1} parent=1 // pred_fallthru
      _
    // Predicated region
    $region10: #{tpu_custom_call.1} parent=1 // pred_check
      _
    $region11: #{tpu_custom_call.1} parent=1 // pred_check_branch
      %41 = sbr.rel (0) target = $region13
    $region12: #{tpu_custom_call.1} parent=1 // pred_region
      _
    $region13: #{tpu_custom_call.1} parent=1 // pred_fallthru
      _
    // Predicated region
    $region14: #{tpu_custom_call.1} parent=1 // pred_check
      _
    $region15: #{tpu_custom_call.1} parent=1 // pred_check_branch
      %43 = sbr.rel (0) target = $region17
    $region16: #{tpu_custom_call.1} parent=1 // pred_region
      _
    $region17: #{tpu_custom_call.1} parent=1 // pred_fallthru
      _
    // Predicated region
    $region18: #{tpu_custom_call.1} parent=1 // pred_check
      _
    $region19: #{tpu_custom_call.1} parent=1 // pred_check_branch
      %45 = sbr.rel (0) target = $region21
    $region20: #{tpu_custom_call.1} parent=1 // pred_region
      %s47 = ssub.s32 256, 256
      %48 = vsyncadd [#allocation12], %s47
      %s49 = sshll.u32 [#allocation13], 4
      %s50 = int_to_ptr.vmem [resolvable:$true] %s49
      %55 = dma.hbm_to_vmem [thread:$0]  %s4, 256, %s50, [#allocation12], 128, 128, 8
    $region21: #{tpu_custom_call.1} parent=1 // pred_fallthru
      _
    // Predicated region
    $region22: #{tpu_custom_call.1} parent=1 // pred_check
      _
    $region23: #{tpu_custom_call.1} parent=1 // pred_check_branch
      %57 = sbr.rel (0) target = $region25
    $region24: #{tpu_custom_call.1} parent=1 // pred_region
      _
    $region25: #{tpu_custom_call.1} parent=1 // pred_fallthru
      _
    // Predicated region
    $region26: #{tpu_custom_call.1} parent=1 // pred_check
      _
    $region27: #{tpu_custom_call.1} parent=1 // pred_check_branch
      %59 = sbr.rel (0) target = $region29
    $region28: #{tpu_custom_call.1} parent=1 // pred_region
      %s61 = ssub.s32 512, 512
      %62 = vsyncadd [#allocation15], %s61
      %s63 = sshll.u32 [#allocation14], 4
      %s64 = int_to_ptr.vmem [resolvable:$true] %s63
      %69 = dma.hbm_to_vmem [thread:$0]  %s6, 512, %s64, [#allocation15], 128, 128, 8
    $region29: #{tpu_custom_call.1} parent=1 // pred_fallthru
      _
    // Predicated region
    $region30: #{tpu_custom_call.1} parent=1 // pred_check
      _
    $region31: #{tpu_custom_call.1} parent=1 // pred_check_branch
      %71 = sbr.rel (0) target = $region33
    $region32: #{tpu_custom_call.1} parent=1 // pred_region
      %72 = dma.done [#allocation9], 256
    $region33: #{tpu_custom_call.1} parent=1 // pred_fallthru
      _
    // Predicated region
    $region34: #{tpu_custom_call.1} parent=1 // pred_check
      _
    $region35: #{tpu_custom_call.1} parent=1 // pred_check_branch
      %74 = sbr.rel (0) target = $region37
    $region36: #{tpu_custom_call.1} parent=1 // pred_region
      %75 = dma.done [#allocation12], 1024
    $region37: #{tpu_custom_call.1} parent=1 // pred_fallthru
      _
    // Predicated region
    $region38: #{tpu_custom_call.1} parent=1 // pred_check
      _
    $region39: #{tpu_custom_call.1} parent=1 // pred_check_branch
      %77 = sbr.rel (0) target = $region41
    $region40: #{tpu_custom_call.1} parent=1 // pred_region
      %78 = dma.done [#allocation12], 256
    $region41: #{tpu_custom_call.1} parent=1 // pred_fallthru
      _
    // Predicated region
    $region42: #{tpu_custom_call.1} parent=1 // pred_check
      _
    $region43: #{tpu_custom_call.1} parent=1 // pred_check_branch
      %80 = sbr.rel (0) target = $region45
    $region44: #{tpu_custom_call.1} parent=1 // pred_region
      %81 = dma.done [#allocation15], 512
    $region45: #{tpu_custom_call.1} parent=1 // pred_fallthru
      _
    %p82 = scmp.eq.s32.totalorder 0, 0
    // Predicated region
    $region46: #{tpu_custom_call.1} parent=1 // pred_check
      %p83 = pneg %p82
    $region47: #{tpu_custom_call.1} parent=1 // pred_check_branch
      %85 = sbr.rel (%p83) target = $region49
    $region48: #{tpu_custom_call.1} parent=1 // pred_region
      %vm86 = vcmask 261120
      %87 = vst.msk [vmem:[#allocation2] sm:$0xff] %vm86, 0.0
      %88 = vst.msk [vmem:[#allocation2 + $0x8] sm:$0xff] %vm86, 0.0
      %89 = vst.msk [vmem:[#allocation2 + $0x10] sm:$0xff] %vm86, 0.0
      %90 = vst.msk [vmem:[#allocation2 + $0x18] sm:$0xff] %vm86, 0.0
      %vm91 = vcmask 259072
      %92 = vst.msk [vmem:[#allocation3] sm:$0x3f] %vm91, 0.0
    $region49: #{tpu_custom_call.1} parent=1 // pred_fallthru
      _
    %v93 = vld [vmem:[#allocation8] sm:$0xff]
    %v94 = vld [vmem:[#allocation8 + $0x8] sm:$0xff]
    %v95 = vld [vmem:[#allocation11] sm:$0xff]
    %v96 = vld [vmem:[#allocation11 + $0x8] sm:$0xff]
    %v97 = vld [vmem:[#allocation11 + $0x10] sm:$0xff]
    %v98 = vld [vmem:[#allocation11 + $0x18] sm:$0xff]
    %v99 = vld [vmem:[#allocation11 + $0x20] sm:$0xff]
    %v100 = vld [vmem:[#allocation11 + $0x28] sm:$0xff]
    %v101 = vld [vmem:[#allocation11 + $0x30] sm:$0xff]
    %v102 = vld [vmem:[#allocation11 + $0x38] sm:$0xff]
    %vm103 = vcmask 261120
    %v105 = vsel %vm103, %v93, 0
    %v108 = vsel %vm103, %v94, 0
    %110 = vmatprep.subr.mxu0 %v96
    %111 = vmatpush1.msra.mxu0 %v95
    %112 = vmatprep.subr.mxu0 %v98
    %113 = vmatpush1.msra.mxu0 %v97
    %114 = vmatprep.subr.mxu0 %v100
    %115 = vmatpush1.msra.mxu0 %v99
    %116 = vmatprep.subr.mxu0 %v102
    %117 = vmatpush1.msra.mxu0 %v101
    %118 = vmatprep.subr.mxu0 0.0
    %119 = vmatpush1.msra.mxu0 0.0
    %120 = vmatprep.subr.mxu0 0.0
    %121 = vmatpush1.msra.mxu0 0.0
    %122 = vmatprep.subr.mxu0 0.0
    %123 = vmatpush1.msra.mxu0 0.0
    %124 = vmatprep.subr.mxu0 0.0
    %125 = vmatpush1.msra.mxu0 0.0
    %126 = vmatprep.subr.mxu0 0.0
    %127 = vmatpush1.msra.mxu0 0.0
    %128 = vmatprep.subr.mxu0 0.0
    %129 = vmatpush1.msra.mxu0 0.0
    %130 = vmatprep.subr.mxu0 0.0
    %131 = vmatpush1.msra.mxu0 0.0
    %132 = vmatprep.subr.mxu0 0.0
    %133 = vmatpush1.msra.mxu0 0.0
    %134 = vmatprep.subr.mxu0 0.0
    %135 = vmatpush1.msra.mxu0 0.0
    %136 = vmatprep.subr.mxu0 0.0
    %137 = vmatpush1.msra.mxu0 0.0
    %138 = vmatprep.subr.mxu0 0.0
    %139 = vmatpush1.msra.mxu0 0.0
    %140 = vmatprep.subr.mxu0 0.0
    %141 = vmatpush1.msra.mxu0 0.0
    %142 = vmatprep.subr.mxu0 0.0
    %143 = vmatpush1.msra.mxu0 0.0
    %144 = vmatprep.subr.mxu0 0.0
    %145 = vmatpush1.msra.mxu0 0.0
    %146 = vmatprep.subr.mxu0 0.0
    %147 = vmatpush1.msra.mxu0 0.0
    %148 = vmatprep.subr.mxu0 0.0
    %149 = vmatpush1.msra.mxu0 0.0
    %150 = vmatprep.subr.mxu0 0.0
    %151 = vmatpush1.msra.mxu0 0.0
    %152 = vmatprep.subr.mxu0 0.0
    %153 = vmatpush1.msra.mxu0 0.0
    %154 = vmatprep.subr.mxu0 0.0
    %155 = vmatpush1.msra.mxu0 0.0
    %156 = vmatprep.subr.mxu0 0.0
    %157 = vmatpush1.msra.mxu0 0.0
    %158 = vmatprep.subr.mxu0 0.0
    %159 = vmatpush1.msra.mxu0 0.0
    %160 = vmatprep.subr.mxu0 0.0
    %161 = vmatpush1.msra.mxu0 0.0
    %162 = vmatprep.subr.mxu0 0.0
    %163 = vmatpush1.msra.mxu0 0.0
    %164 = vmatprep.subr.mxu0 0.0
    %165 = vmatpush1.msra.mxu0 0.0
    %166 = vmatprep.subr.mxu0 0.0
    %167 = vmatpush1.msra.mxu0 0.0
    %168 = vmatprep.subr.mxu0 0.0
    %169 = vmatpush1.msra.mxu0 0.0
    %170 = vmatprep.subr.mxu0 0.0
    %171 = vmatpush1.msra.mxu0 0.0
    %172 = vmatprep.subr.mxu0 0.0
    %173 = vmatpush1.msra.mxu0 0.0
    %174 = vmatprep.mubr.f32.mxu0 0.0
    %175 = vmatmul.mubr.f32.gmra.mrb[0].mxu0 %v105
    %v176 = vpop.f32.mrb[0].mxu0
    %v177 = vadd.f32 0.0, %v176
    %v178 = vpop.f32.mrb[0].mxu0
    %v179 = vadd.f32 0.0, %v178
    %180 = vmatprep.mubr.f32.mxu0 0.0
    %181 = vmatmul.mubr.f32.gmra.mrb[0].mxu0 %v108
    %v182 = vpop.f32.mrb[0].mxu0
    %v183 = vadd.f32 0.0, %v182
    %v184 = vpop.f32.mrb[0].mxu0
    %v185 = vadd.f32 0.0, %v184
    %186 = vdwg.mxu0
    %v187 = vld [vmem:[%s2] sm:$0x1]
    %v189 = vlaneseq
    %v190 = vshrl.u32 %v189, 7
    %v191 = vsub.s32 0, %v190
    %v192 = vrot.slane %v187, %v191
    %193 = vrot.lane.b32.xlu0 %v192, 64
    %v194 = vpop.permute.xlu0 %193
    %v196 = vadd.f32 %v177, %v194
    %v197 = vadd.f32 %v183, %v194
    %vm198 = vcmp.gt.f32.partialorder %v196, 20.0
    %vm199 = vcmp.gt.f32.partialorder %v197, 20.0
    %v200 = vmin.f32 %v196, 20.0
    %v201 = vmin.f32 %v197, 20.0
    %v202 = vmul.f32 %v200, 1.442695
    %v203 = vpow.pop %v202
    %v204 = vmul.f32 %v201, 1.442695
    %v205 = vpow.pop %v204
    %v206 = vadd.f32 %v203, 1.0
    %v207 = vlog2.pop %v206
    %v208 = vmul.f32 %v207, 0.6931472
    %v209 = vmul.f32 -0.5, %v203
    %v210 = vadd.f32 %v209, 1.0
    %v211 = vmul.f32 %v210, %v203
    %v212 = vand.u32 2147483647, %v203
    %vm213 = vcmp.lt.f32.partialorder %v212, 0.0004427343
    %v214 = vsel %vm213, %v211, %v208
    %v215 = vadd.f32 %v205, 1.0
    %v216 = vlog2.pop %v215
    %v217 = vmul.f32 %v216, 0.6931472
    %v218 = vmul.f32 -0.5, %v205
    %v219 = vadd.f32 %v218, 1.0
    %v220 = vmul.f32 %v219, %v205
    %v221 = vand.u32 2147483647, %v205
    %vm222 = vcmp.lt.f32.partialorder %v221, 0.0004427343
    %v223 = vsel %vm222, %v220, %v217
    %v224 = vsel %vm198, %v196, %v214
    %v225 = vsel %vm199, %v197, %v223
    %226 = vst.msk [vmem:[#allocation3 + $0x6] sm:$0xff] %vm103, %v177
    %227 = vst.msk [vmem:[#allocation3 + $0xe] sm:$0xff] %vm103, %v183
    %v228 = vld [vmem:[%s3] sm:$0xf]
    %v229 = vld [vmem:[#allocation3] sm:$0xff]
    %v230 = vld [vmem:[#allocation3 + $0x8] sm:$0xff]
    %v231 = vlaneseq
    %v232 = vshrl.u32 %v231, 7
    %v233 = vsub.s32 0, %v232
    %v234 = vrot.slane %v228, %v233
    %v235 = vmul.f32 %v229, %v234
    %v236 = vmul.f32 %v230, %v234
    %v237 = vadd.f32 %v235, 0.0
    %v238 = vadd.f32 %v236, 0.0
    %v239 = vld [vmem:[#allocation3 + $0x2] sm:$0xff]
    %v240 = vld [vmem:[#allocation3 + $0xa] sm:$0xff]
    %v241 = vlaneseq
    %v242 = vshrl.u32 %v241, 7
    %v243 = vsub.s32 1, %v242
    %v244 = vrot.slane %v228, %v243
    %v245 = vmul.f32 %v239, %v244
    %v246 = vmul.f32 %v240, %v244
    %v247 = vadd.f32 %v237, %v245
    %v248 = vadd.f32 %v238, %v246
    %v249 = vld [vmem:[#allocation3 + $0x4] sm:$0xff]
    %v250 = vld [vmem:[#allocation3 + $0xc] sm:$0xff]
    %v251 = vlaneseq
    %v252 = vshrl.u32 %v251, 7
    %v253 = vsub.s32 2, %v252
    %v254 = vrot.slane %v228, %v253
    %v255 = vmul.f32 %v249, %v254
    %v256 = vmul.f32 %v250, %v254
    %v257 = vadd.f32 %v247, %v255
    %v258 = vadd.f32 %v248, %v256
    %v259 = vld [vmem:[#allocation3 + $0x6] sm:$0xff]
    %v260 = vld [vmem:[#allocation3 + $0xe] sm:$0xff]
    %v261 = vlaneseq
    %v262 = vshrl.u32 %v261, 7
    %v263 = vsub.s32 3, %v262
    %v264 = vrot.slane %v228, %v263
    %v265 = vmul.f32 %v259, %v264
    %v266 = vmul.f32 %v260, %v264
    %v267 = vadd.f32 %v257, %v265
    %v268 = vadd.f32 %v258, %v266
    %v269 = vsub.f32 0.0, %v267
    %v270 = vsub.f32 0.0, %v268
    %v271 = vmul.f32 %v269, 1.442695
    %v272 = vpow.pop %v271
    %v273 = vmul.f32 %v270, 1.442695
    %v274 = vpow.pop %v273
    %v275 = vadd.f32 %v272, 1.0
    %v276 = vadd.f32 %v274, 1.0
    %v277 = vrcp.pop %v275
    %v278 = vmul.f32 1.0, %v277
    %v279 = vrcp.pop %v276
    %v280 = vmul.f32 1.0, %v279
    %v281 = vmul.f32 %v267, %v278
    %v282 = vmul.f32 %v268, %v280
    %s283 = sadd.s32 0, 1
    %p284 = scmp.lt.s32.totalorder %s283, 1
    // Predicated region
    $region50: #{tpu_custom_call.1} parent=1 // pred_check
      %p285 = pneg %p284
    $region51: #{tpu_custom_call.1} parent=1 // pred_check_branch
      %287 = sbr.rel (%p285) target = $region53
    $region52: #{tpu_custom_call.1} parent=1 // pred_region
      %v288 = vld [vmem:[#allocation3 + $0x10] sm:$0x3f]
      %vm289 = vcmask 259072
      %290 = vst.msk [vmem:[#allocation3] sm:$0x3f] %vm289, %v288
    $region53: #{tpu_custom_call.1} parent=1 // pred_fallthru
      _
    %v291 = vld [vmem:[#allocation13] sm:$0xff]
    %v292 = vld [vmem:[#allocation13 + $0x8] sm:$0xff]
    %v293 = vmul.f32 %v291, 1.442695
    %v294 = vpow.pop %v293
    %v295 = vmul.f32 %v292, 1.442695
    %v296 = vpow.pop %v295
    %v297 = vsub.f32 0.0, %v294
    %v298 = vsub.f32 0.0, %v296
    %v299 = vand.u32 2147483647, %v297
    %v300 = vand.u32 2147483647, %v298
    %vm301 = vcmp.lt.f32.partialorder %v299, 1e-08
    %vm302 = vcmp.lt.f32.partialorder %v300, 1e-08
    %v303 = vadd.f32 %v297, 1e-10
    %v304 = vadd.f32 %v298, 1e-10
    %v305 = vrcp.pop %v303
    %v306 = vmul.f32 1.0, %v305
    %v307 = vrcp.pop %v304
    %v308 = vmul.f32 1.0, %v307
    %v309 = vsel %vm301, 0.0, %v306
    %v310 = vsel %vm302, 0.0, %v308
    %v311 = vsel %vm301, 1.0, 0.0
    %v312 = vsel %vm302, 1.0, 0.0
    %v315 = vcombine.high %v224, %v224
    %v317 = vunpack.c.l.s4 1966171168
    %v318 = vunpack.c.0.s8 %v317
    %v319 = vlaneseq
    %v320 = vshrl.u32 %v319, 7
    %v321 = vsub.s32 %v318, %v320
    %v322 = vrot.slane %v224, %v321
    %v324 = vunpack.c.l.s4 1966171168
    %v325 = vunpack.c.0.s8 %v324
    %v326 = vlaneseq
    %v327 = vshrl.u32 %v326, 7
    %v328 = vsub.s32 %v325, %v327
    %v329 = vrot.slane %v315, %v328
    %v330 = vcombine.high %v322, %v322
    %v331 = vcombine.high %v329, %v329
    %v333 = vunpack.c.l.s4 1966171168
    %v334 = vunpack.c.0.s8 %v333
    %v335 = vlaneseq
    %v336 = vshrl.u32 %v335, 7
    %v337 = vsub.s32 %v334, %v336
    %v338 = vrot.slane %v322, %v337
    %v340 = vunpack.c.l.s4 1966171168
    %v341 = vunpack.c.0.s8 %v340
    %v342 = vlaneseq
    %v343 = vshrl.u32 %v342, 7
    %v344 = vsub.s32 %v341, %v343
    %v345 = vrot.slane %v329, %v344
    %v347 = vunpack.c.l.s4 1966171168
    %v348 = vunpack.c.0.s8 %v347
    %v349 = vlaneseq
    %v350 = vshrl.u32 %v349, 7
    %v351 = vsub.s32 %v348, %v350
    %v352 = vrot.slane %v330, %v351
    %v354 = vunpack.c.l.s4 1966171168
    %v355 = vunpack.c.0.s8 %v354
    %v356 = vlaneseq
    %v357 = vshrl.u32 %v356, 7
    %v358 = vsub.s32 %v355, %v357
    %v359 = vrot.slane %v331, %v358
    %v360 = vcombine.high %v338, %v338
    %v361 = vcombine.high %v345, %v345
    %v362 = vcombine.high %v352, %v352
    %v363 = vcombine.high %v359, %v359
    %v364 = vcombine.high %v225, %v225
    %v366 = vunpack.c.l.s4 1966171168
    %v367 = vunpack.c.0.s8 %v366
    %v368 = vlaneseq
    %v369 = vshrl.u32 %v368, 7
    %v370 = vsub.s32 %v367, %v369
    %v371 = vrot.slane %v225, %v370
    %v373 = vunpack.c.l.s4 1966171168
    %v374 = vunpack.c.0.s8 %v373
    %v375 = vlaneseq
    %v376 = vshrl.u32 %v375, 7
    %v377 = vsub.s32 %v374, %v376
    %v378 = vrot.slane %v364, %v377
    %v379 = vcombine.high %v371, %v371
    %v380 = vcombine.high %v378, %v378
    %v382 = vunpack.c.l.s4 1966171168
    %v383 = vunpack.c.0.s8 %v382
    %v384 = vlaneseq
    %v385 = vshrl.u32 %v384, 7
    %v386 = vsub.s32 %v383, %v385
    %v387 = vrot.slane %v371, %v386
    %v389 = vunpack.c.l.s4 1966171168
    %v390 = vunpack.c.0.s8 %v389
    %v391 = vlaneseq
    %v392 = vshrl.u32 %v391, 7
    %v393 = vsub.s32 %v390, %v392
    %v394 = vrot.slane %v378, %v393
    %v396 = vunpack.c.l.s4 1966171168
    %v397 = vunpack.c.0.s8 %v396
    %v398 = vlaneseq
    %v399 = vshrl.u32 %v398, 7
    %v400 = vsub.s32 %v397, %v399
    %v401 = vrot.slane %v379, %v400
    %v403 = vunpack.c.l.s4 1966171168
    %v404 = vunpack.c.0.s8 %v403
    %v405 = vlaneseq
    %v406 = vshrl.u32 %v405, 7
    %v407 = vsub.s32 %v404, %v406
    %v408 = vrot.slane %v380, %v407
    %v409 = vcombine.high %v387, %v387
    %v410 = vcombine.high %v394, %v394
    %v411 = vcombine.high %v401, %v401
    %v412 = vcombine.high %v408, %v408
    %v413 = vlaneseq
    %v414 = vshrl.u32 %v413, 7
    %v415 = vsub.s32 0, %v414
    %v416 = vrot.slane %v338, %v415
    %v417 = vlaneseq
    %v418 = vshrl.u32 %v417, 7
    %v419 = vsub.s32 0, %v418
    %v420 = vrot.slane %v352, %v419
    %v421 = vlaneseq
    %v422 = vshrl.u32 %v421, 7
    %v423 = vsub.s32 0, %v422
    %v424 = vrot.slane %v360, %v423
    %v425 = vlaneseq
    %v426 = vshrl.u32 %v425, 7
    %v427 = vsub.s32 0, %v426
    %v428 = vrot.slane %v362, %v427
    %v429 = vlaneseq
    %v430 = vshrl.u32 %v429, 7
    %v431 = vsub.s32 0, %v430
    %v432 = vrot.slane %v345, %v431
    %v433 = vlaneseq
    %v434 = vshrl.u32 %v433, 7
    %v435 = vsub.s32 0, %v434
    %v436 = vrot.slane %v359, %v435
    %v437 = vlaneseq
    %v438 = vshrl.u32 %v437, 7
    %v439 = vsub.s32 0, %v438
    %v440 = vrot.slane %v361, %v439
    %v441 = vlaneseq
    %v442 = vshrl.u32 %v441, 7
    %v443 = vsub.s32 0, %v442
    %v444 = vrot.slane %v363, %v443
    %v445 = vlaneseq
    %v446 = vshrl.u32 %v445, 7
    %v447 = vsub.s32 0, %v446
    %v448 = vrot.slane %v387, %v447
    %v449 = vlaneseq
    %v450 = vshrl.u32 %v449, 7
    %v451 = vsub.s32 0, %v450
    %v452 = vrot.slane %v401, %v451
    %v453 = vlaneseq
    %v454 = vshrl.u32 %v453, 7
    %v455 = vsub.s32 0, %v454
    %v456 = vrot.slane %v409, %v455
    %v457 = vlaneseq
    %v458 = vshrl.u32 %v457, 7
    %v459 = vsub.s32 0, %v458
    %v460 = vrot.slane %v411, %v459
    %v461 = vlaneseq
    %v462 = vshrl.u32 %v461, 7
    %v463 = vsub.s32 0, %v462
    %v464 = vrot.slane %v394, %v463
    %v465 = vlaneseq
    %v466 = vshrl.u32 %v465, 7
    %v467 = vsub.s32 0, %v466
    %v468 = vrot.slane %v408, %v467
    %v469 = vlaneseq
    %v470 = vshrl.u32 %v469, 7
    %v471 = vsub.s32 0, %v470
    %v472 = vrot.slane %v410, %v471
    %v473 = vlaneseq
    %v474 = vshrl.u32 %v473, 7
    %v475 = vsub.s32 0, %v474
    %v476 = vrot.slane %v412, %v475
    %495 = vrot.lane.b32.xlu0 %v297, 64
    %v496 = vpop.permute.xlu0 %495
    %497 = vrot.lane.b32.xlu0 %v298, 64
    %v498 = vpop.permute.xlu0 %497
    %v501 = vmul.f32 %v416, %v496
    %v502 = vmul.f32 %v416, %v498
    %v503 = vmul.f32 %v420, %v496
    %v504 = vmul.f32 %v420, %v498
    %v505 = vmul.f32 %v424, %v496
    %v506 = vmul.f32 %v424, %v498
    %v507 = vmul.f32 %v428, %v496
    %v508 = vmul.f32 %v428, %v498
    %v509 = vmul.f32 %v432, %v496
    %v510 = vmul.f32 %v432, %v498
    %v511 = vmul.f32 %v436, %v496
    %v512 = vmul.f32 %v436, %v498
    %v513 = vmul.f32 %v440, %v496
    %v514 = vmul.f32 %v440, %v498
    %v515 = vmul.f32 %v444, %v496
    %v516 = vmul.f32 %v444, %v498
    %v517 = vmul.f32 %v448, %v496
    %v518 = vmul.f32 %v448, %v498
    %v519 = vmul.f32 %v452, %v496
    %v520 = vmul.f32 %v452, %v498
    %v521 = vmul.f32 %v456, %v496
    %v522 = vmul.f32 %v456, %v498
    %v523 = vmul.f32 %v460, %v496
    %v524 = vmul.f32 %v460, %v498
    %v525 = vmul.f32 %v464, %v496
    %v526 = vmul.f32 %v464, %v498
    %v527 = vmul.f32 %v468, %v496
    %v528 = vmul.f32 %v468, %v498
    %v529 = vmul.f32 %v472, %v496
    %v530 = vmul.f32 %v472, %v498
    %v531 = vmul.f32 %v476, %v496
    %v532 = vmul.f32 %v476, %v498
    %v533 = vmul.f32 %v501, 1.442695
    %v534 = vpow.pop %v533
    %v535 = vmul.f32 %v502, 1.442695
    %v536 = vpow.pop %v535
    %v537 = vmul.f32 %v503, 1.442695
    %v538 = vpow.pop %v537
    %v539 = vmul.f32 %v504, 1.442695
    %v540 = vpow.pop %v539
    %v541 = vmul.f32 %v505, 1.442695
    %v542 = vpow.pop %v541
    %v543 = vmul.f32 %v506, 1.442695
    %v544 = vpow.pop %v543
    %v545 = vmul.f32 %v507, 1.442695
    %v546 = vpow.pop %v545
    %v547 = vmul.f32 %v508, 1.442695
    %v548 = vpow.pop %v547
    %v549 = vmul.f32 %v509, 1.442695
    %v550 = vpow.pop %v549
    %v551 = vmul.f32 %v510, 1.442695
    %v552 = vpow.pop %v551
    %v553 = vmul.f32 %v511, 1.442695
    %v554 = vpow.pop %v553
    %v555 = vmul.f32 %v512, 1.442695
    %v556 = vpow.pop %v555
    %v557 = vmul.f32 %v513, 1.442695
    %v558 = vpow.pop %v557
    %v559 = vmul.f32 %v514, 1.442695
    %v560 = vpow.pop %v559
    %v561 = vmul.f32 %v515, 1.442695
    %v562 = vpow.pop %v561
    %v563 = vmul.f32 %v516, 1.442695
    %v564 = vpow.pop %v563
    %v565 = vmul.f32 %v517, 1.442695
    %v566 = vpow.pop %v565
    %v567 = vmul.f32 %v518, 1.442695
    %v568 = vpow.pop %v567
    %v569 = vmul.f32 %v519, 1.442695
    %v570 = vpow.pop %v569
    %v571 = vmul.f32 %v520, 1.442695
    %v572 = vpow.pop %v571
    %v573 = vmul.f32 %v521, 1.442695
    %v574 = vpow.pop %v573
    %v575 = vmul.f32 %v522, 1.442695
    %v576 = vpow.pop %v575
    %v577 = vmul.f32 %v523, 1.442695
    %v578 = vpow.pop %v577
    %v579 = vmul.f32 %v524, 1.442695
    %v580 = vpow.pop %v579
    %v581 = vmul.f32 %v525, 1.442695
    %v582 = vpow.pop %v581
    %v583 = vmul.f32 %v526, 1.442695
    %v584 = vpow.pop %v583
    %v585 = vmul.f32 %v527, 1.442695
    %v586 = vpow.pop %v585
    %v587 = vmul.f32 %v528, 1.442695
    %v588 = vpow.pop %v587
    %v589 = vmul.f32 %v529, 1.442695
    %v590 = vpow.pop %v589
    %v591 = vmul.f32 %v530, 1.442695
    %v592 = vpow.pop %v591
    %v593 = vmul.f32 %v531, 1.442695
    %v594 = vpow.pop %v593
    %v595 = vmul.f32 %v532, 1.442695
    %v596 = vpow.pop %v595
    %v597 = vsub.f32 %v534, 1.0
    %v598 = vsub.f32 %v536, 1.0
    %v599 = vsub.f32 %v538, 1.0
    %v600 = vsub.f32 %v540, 1.0
    %v601 = vsub.f32 %v542, 1.0
    %v602 = vsub.f32 %v544, 1.0
    %v603 = vsub.f32 %v546, 1.0
    %v604 = vsub.f32 %v548, 1.0
    %v605 = vsub.f32 %v550, 1.0
    %v606 = vsub.f32 %v552, 1.0
    %v607 = vsub.f32 %v554, 1.0
    %v608 = vsub.f32 %v556, 1.0
    %v609 = vsub.f32 %v558, 1.0
    %v610 = vsub.f32 %v560, 1.0
    %v611 = vsub.f32 %v562, 1.0
    %v612 = vsub.f32 %v564, 1.0
    %v613 = vsub.f32 %v566, 1.0
    %v614 = vsub.f32 %v568, 1.0
    %v615 = vsub.f32 %v570, 1.0
    %v616 = vsub.f32 %v572, 1.0
    %v617 = vsub.f32 %v574, 1.0
    %v618 = vsub.f32 %v576, 1.0
    %v619 = vsub.f32 %v578, 1.0
    %v620 = vsub.f32 %v580, 1.0
    %v621 = vsub.f32 %v582, 1.0
    %v622 = vsub.f32 %v584, 1.0
    %v623 = vsub.f32 %v586, 1.0
    %v624 = vsub.f32 %v588, 1.0
    %v625 = vsub.f32 %v590, 1.0
    %v626 = vsub.f32 %v592, 1.0
    %v627 = vsub.f32 %v594, 1.0
    %v628 = vsub.f32 %v596, 1.0
    %631 = vrot.lane.b32.xlu0 %v309, 64
    %v632 = vpop.permute.xlu0 %631
    %633 = vrot.lane.b32.xlu0 %v310, 64
    %v634 = vpop.permute.xlu0 %633
    %v637 = vmul.f32 %v597, %v632
    %v638 = vmul.f32 %v598, %v634
    %v639 = vmul.f32 %v599, %v632
    %v640 = vmul.f32 %v600, %v634
    %v641 = vmul.f32 %v601, %v632
    %v642 = vmul.f32 %v602, %v634
    %v643 = vmul.f32 %v603, %v632
    %v644 = vmul.f32 %v604, %v634
    %v645 = vmul.f32 %v605, %v632
    %v646 = vmul.f32 %v606, %v634
    %v647 = vmul.f32 %v607, %v632
    %v648 = vmul.f32 %v608, %v634
    %v649 = vmul.f32 %v609, %v632
    %v650 = vmul.f32 %v610, %v634
    %v651 = vmul.f32 %v611, %v632
    %v652 = vmul.f32 %v612, %v634
    %v653 = vmul.f32 %v613, %v632
    %v654 = vmul.f32 %v614, %v634
    %v655 = vmul.f32 %v615, %v632
    %v656 = vmul.f32 %v616, %v634
    %v657 = vmul.f32 %v617, %v632
    %v658 = vmul.f32 %v618, %v634
    %v659 = vmul.f32 %v619, %v632
    %v660 = vmul.f32 %v620, %v634
    %v661 = vmul.f32 %v621, %v632
    %v662 = vmul.f32 %v622, %v634
    %v663 = vmul.f32 %v623, %v632
    %v664 = vmul.f32 %v624, %v634
    %v665 = vmul.f32 %v625, %v632
    %v666 = vmul.f32 %v626, %v634
    %v667 = vmul.f32 %v627, %v632
    %v668 = vmul.f32 %v628, %v634
    %669 = vrot.lane.b32.xlu0 %v416, 64
    %v670 = vpop.permute.xlu0 %669
    %671 = vrot.lane.b32.xlu0 %v420, 64
    %v672 = vpop.permute.xlu0 %671
    %673 = vrot.lane.b32.xlu0 %v424, 64
    %v674 = vpop.permute.xlu0 %673
    %675 = vrot.lane.b32.xlu0 %v428, 64
    %v676 = vpop.permute.xlu0 %675
    %677 = vrot.lane.b32.xlu0 %v432, 64
    %v678 = vpop.permute.xlu0 %677
    %679 = vrot.lane.b32.xlu0 %v436, 64
    %v680 = vpop.permute.xlu0 %679
    %681 = vrot.lane.b32.xlu0 %v440, 64
    %v682 = vpop.permute.xlu0 %681
    %683 = vrot.lane.b32.xlu0 %v444, 64
    %v684 = vpop.permute.xlu0 %683
    %685 = vrot.lane.b32.xlu0 %v448, 64
    %v686 = vpop.permute.xlu0 %685
    %687 = vrot.lane.b32.xlu0 %v452, 64
    %v688 = vpop.permute.xlu0 %687
    %689 = vrot.lane.b32.xlu0 %v456, 64
    %v690 = vpop.permute.xlu0 %689
    %691 = vrot.lane.b32.xlu0 %v460, 64
    %v692 = vpop.permute.xlu0 %691
    %693 = vrot.lane.b32.xlu0 %v464, 64
    %v694 = vpop.permute.xlu0 %693
    %695 = vrot.lane.b32.xlu0 %v468, 64
    %v696 = vpop.permute.xlu0 %695
    %697 = vrot.lane.b32.xlu0 %v472, 64
    %v698 = vpop.permute.xlu0 %697
    %699 = vrot.lane.b32.xlu0 %v476, 64
    %v700 = vpop.permute.xlu0 %699
    %v717 = vmul.f32 %v311, %v670
    %v718 = vmul.f32 %v312, %v670
    %v719 = vmul.f32 %v311, %v672
    %v720 = vmul.f32 %v312, %v672
    %v721 = vmul.f32 %v311, %v674
    %v722 = vmul.f32 %v312, %v674
    %v723 = vmul.f32 %v311, %v676
    %v724 = vmul.f32 %v312, %v676
    %v725 = vmul.f32 %v311, %v678
    %v726 = vmul.f32 %v312, %v678
    %v727 = vmul.f32 %v311, %v680
    %v728 = vmul.f32 %v312, %v680
    %v729 = vmul.f32 %v311, %v682
    %v730 = vmul.f32 %v312, %v682
    %v731 = vmul.f32 %v311, %v684
    %v732 = vmul.f32 %v312, %v684
    %v733 = vmul.f32 %v311, %v686
    %v734 = vmul.f32 %v312, %v686
    %v735 = vmul.f32 %v311, %v688
    %v736 = vmul.f32 %v312, %v688
    %v737 = vmul.f32 %v311, %v690
    %v738 = vmul.f32 %v312, %v690
    %v739 = vmul.f32 %v311, %v692
    %v740 = vmul.f32 %v312, %v692
    %v741 = vmul.f32 %v311, %v694
    %v742 = vmul.f32 %v312, %v694
    %v743 = vmul.f32 %v311, %v696
    %v744 = vmul.f32 %v312, %v696
    %v745 = vmul.f32 %v311, %v698
    %v746 = vmul.f32 %v312, %v698
    %v747 = vmul.f32 %v311, %v700
    %v748 = vmul.f32 %v312, %v700
    %781 = vrot.lane.b32.xlu0 %v717, 64
    %v782 = vpop.permute.xlu0 %781
    %783 = vrot.lane.b32.xlu0 %v718, 64
    %v784 = vpop.permute.xlu0 %783
    %785 = vrot.lane.b32.xlu0 %v719, 64
    %v786 = vpop.permute.xlu0 %785
    %787 = vrot.lane.b32.xlu0 %v720, 64
    %v788 = vpop.permute.xlu0 %787
    %789 = vrot.lane.b32.xlu0 %v721, 64
    %v790 = vpop.permute.xlu0 %789
    %791 = vrot.lane.b32.xlu0 %v722, 64
    %v792 = vpop.permute.xlu0 %791
    %793 = vrot.lane.b32.xlu0 %v723, 64
    %v794 = vpop.permute.xlu0 %793
    %795 = vrot.lane.b32.xlu0 %v724, 64
    %v796 = vpop.permute.xlu0 %795
    %797 = vrot.lane.b32.xlu0 %v725, 64
    %v798 = vpop.permute.xlu0 %797
    %799 = vrot.lane.b32.xlu0 %v726, 64
    %v800 = vpop.permute.xlu0 %799
    %801 = vrot.lane.b32.xlu0 %v727, 64
    %v802 = vpop.permute.xlu0 %801
    %803 = vrot.lane.b32.xlu0 %v728, 64
    %v804 = vpop.permute.xlu0 %803
    %805 = vrot.lane.b32.xlu0 %v729, 64
    %v806 = vpop.permute.xlu0 %805
    %807 = vrot.lane.b32.xlu0 %v730, 64
    %v808 = vpop.permute.xlu0 %807
    %809 = vrot.lane.b32.xlu0 %v731, 64
    %v810 = vpop.permute.xlu0 %809
    %811 = vrot.lane.b32.xlu0 %v732, 64
    %v812 = vpop.permute.xlu0 %811
    %813 = vrot.lane.b32.xlu0 %v733, 64
    %v814 = vpop.permute.xlu0 %813
    %815 = vrot.lane.b32.xlu0 %v734, 64
    %v816 = vpop.permute.xlu0 %815
    %817 = vrot.lane.b32.xlu0 %v735, 64
    %v818 = vpop.permute.xlu0 %817
    %819 = vrot.lane.b32.xlu0 %v736, 64
    %v820 = vpop.permute.xlu0 %819
    %821 = vrot.lane.b32.xlu0 %v737, 64
    %v822 = vpop.permute.xlu0 %821
    %823 = vrot.lane.b32.xlu0 %v738, 64
    %v824 = vpop.permute.xlu0 %823
    %825 = vrot.lane.b32.xlu0 %v739, 64
    %v826 = vpop.permute.xlu0 %825
    %827 = vrot.lane.b32.xlu0 %v740, 64
    %v828 = vpop.permute.xlu0 %827
    %829 = vrot.lane.b32.xlu0 %v741, 64
    %v830 = vpop.permute.xlu0 %829
    %831 = vrot.lane.b32.xlu0 %v742, 64
    %v832 = vpop.permute.xlu0 %831
    %833 = vrot.lane.b32.xlu0 %v743, 64
    %v834 = vpop.permute.xlu0 %833
    %835 = vrot.lane.b32.xlu0 %v744, 64
    %v836 = vpop.permute.xlu0 %835
    %837 = vrot.lane.b32.xlu0 %v745, 64
    %v838 = vpop.permute.xlu0 %837
    %839 = vrot.lane.b32.xlu0 %v746, 64
    %v840 = vpop.permute.xlu0 %839
    %841 = vrot.lane.b32.xlu0 %v747, 64
    %v842 = vpop.permute.xlu0 %841
    %843 = vrot.lane.b32.xlu0 %v748, 64
    %v844 = vpop.permute.xlu0 %843
    %v877 = vadd.f32 %v637, %v782
    %v878 = vadd.f32 %v638, %v784
    %v879 = vadd.f32 %v639, %v786
    %v880 = vadd.f32 %v640, %v788
    %v881 = vadd.f32 %v641, %v790
    %v882 = vadd.f32 %v642, %v792
    %v883 = vadd.f32 %v643, %v794
    %v884 = vadd.f32 %v644, %v796
    %v885 = vadd.f32 %v645, %v798
    %v886 = vadd.f32 %v646, %v800
    %v887 = vadd.f32 %v647, %v802
    %v888 = vadd.f32 %v648, %v804
    %v889 = vadd.f32 %v649, %v806
    %v890 = vadd.f32 %v650, %v808
    %v891 = vadd.f32 %v651, %v810
    %v892 = vadd.f32 %v652, %v812
    %v893 = vadd.f32 %v653, %v814
    %v894 = vadd.f32 %v654, %v816
    %v895 = vadd.f32 %v655, %v818
    %v896 = vadd.f32 %v656, %v820
    %v897 = vadd.f32 %v657, %v822
    %v898 = vadd.f32 %v658, %v824
    %v899 = vadd.f32 %v659, %v826
    %v900 = vadd.f32 %v660, %v828
    %v901 = vadd.f32 %v661, %v830
    %v902 = vadd.f32 %v662, %v832
    %v903 = vadd.f32 %v663, %v834
    %v904 = vadd.f32 %v664, %v836
    %v905 = vadd.f32 %v665, %v838
    %v906 = vadd.f32 %v666, %v840
    %v907 = vadd.f32 %v667, %v842
    %v908 = vadd.f32 %v668, %v844
    %941 = vrot.lane.b32.xlu0 %v534, 64
    %v942 = vpop.permute.xlu0 %941
    %943 = vrot.lane.b32.xlu0 %v536, 64
    %v944 = vpop.permute.xlu0 %943
    %945 = vrot.lane.b32.xlu0 %v538, 64
    %v946 = vpop.permute.xlu0 %945
    %947 = vrot.lane.b32.xlu0 %v540, 64
    %v948 = vpop.permute.xlu0 %947
    %949 = vrot.lane.b32.xlu0 %v542, 64
    %v950 = vpop.permute.xlu0 %949
    %951 = vrot.lane.b32.xlu0 %v544, 64
    %v952 = vpop.permute.xlu0 %951
    %953 = vrot.lane.b32.xlu0 %v546, 64
    %v954 = vpop.permute.xlu0 %953
    %955 = vrot.lane.b32.xlu0 %v548, 64
    %v956 = vpop.permute.xlu0 %955
    %957 = vrot.lane.b32.xlu0 %v550, 64
    %v958 = vpop.permute.xlu0 %957
    %959 = vrot.lane.b32.xlu0 %v552, 64
    %v960 = vpop.permute.xlu0 %959
    %961 = vrot.lane.b32.xlu0 %v554, 64
    %v962 = vpop.permute.xlu0 %961
    %963 = vrot.lane.b32.xlu0 %v556, 64
    %v964 = vpop.permute.xlu0 %963
    %965 = vrot.lane.b32.xlu0 %v558, 64
    %v966 = vpop.permute.xlu0 %965
    %967 = vrot.lane.b32.xlu0 %v560, 64
    %v968 = vpop.permute.xlu0 %967
    %969 = vrot.lane.b32.xlu0 %v562, 64
    %v970 = vpop.permute.xlu0 %969
    %971 = vrot.lane.b32.xlu0 %v564, 64
    %v972 = vpop.permute.xlu0 %971
    %973 = vrot.lane.b32.xlu0 %v566, 64
    %v974 = vpop.permute.xlu0 %973
    %975 = vrot.lane.b32.xlu0 %v568, 64
    %v976 = vpop.permute.xlu0 %975
    %977 = vrot.lane.b32.xlu0 %v570, 64
    %v978 = vpop.permute.xlu0 %977
    %979 = vrot.lane.b32.xlu0 %v572, 64
    %v980 = vpop.permute.xlu0 %979
    %981 = vrot.lane.b32.xlu0 %v574, 64
    %v982 = vpop.permute.xlu0 %981
    %983 = vrot.lane.b32.xlu0 %v576, 64
    %v984 = vpop.permute.xlu0 %983
    %985 = vrot.lane.b32.xlu0 %v578, 64
    %v986 = vpop.permute.xlu0 %985
    %987 = vrot.lane.b32.xlu0 %v580, 64
    %v988 = vpop.permute.xlu0 %987
    %989 = vrot.lane.b32.xlu0 %v582, 64
    %v990 = vpop.permute.xlu0 %989
    %991 = vrot.lane.b32.xlu0 %v584, 64
    %v992 = vpop.permute.xlu0 %991
    %993 = vrot.lane.b32.xlu0 %v586, 64
    %v994 = vpop.permute.xlu0 %993
    %995 = vrot.lane.b32.xlu0 %v588, 64
    %v996 = vpop.permute.xlu0 %995
    %997 = vrot.lane.b32.xlu0 %v590, 64
    %v998 = vpop.permute.xlu0 %997
    %999 = vrot.lane.b32.xlu0 %v592, 64
    %v1000 = vpop.permute.xlu0 %999
    %1001 = vrot.lane.b32.xlu0 %v594, 64
    %v1002 = vpop.permute.xlu0 %1001
    %1003 = vrot.lane.b32.xlu0 %v596, 64
    %v1004 = vpop.permute.xlu0 %1003
    %1037 = vst.msk [vmem:[#allocation4] sm:$0xff] %vm103, %v942
    %1038 = vst.msk [vmem:[#allocation4 + $0x8] sm:$0xff] %vm103, %v944
    %1039 = vst.msk [vmem:[#allocation4 + $0x10] sm:$0xff] %vm103, %v946
    %1040 = vst.msk [vmem:[#allocation4 + $0x18] sm:$0xff] %vm103, %v948
    %1041 = vst.msk [vmem:[#allocation4 + $0x20] sm:$0xff] %vm103, %v950
    %1042 = vst.msk [vmem:[#allocation4 + $0x28] sm:$0xff] %vm103, %v952
    %1043 = vst.msk [vmem:[#allocation4 + $0x30] sm:$0xff] %vm103, %v954
    %1044 = vst.msk [vmem:[#allocation4 + $0x38] sm:$0xff] %vm103, %v956
    %1045 = vst.msk [vmem:[#allocation4 + $0x40] sm:$0xff] %vm103, %v958
    %1046 = vst.msk [vmem:[#allocation4 + $0x48] sm:$0xff] %vm103, %v960
    %1047 = vst.msk [vmem:[#allocation4 + $0x50] sm:$0xff] %vm103, %v962
    %1048 = vst.msk [vmem:[#allocation4 + $0x58] sm:$0xff] %vm103, %v964
    %1049 = vst.msk [vmem:[#allocation4 + $0x60] sm:$0xff] %vm103, %v966
    %1050 = vst.msk [vmem:[#allocation4 + $0x68] sm:$0xff] %vm103, %v968
    %1051 = vst.msk [vmem:[#allocation4 + $0x70] sm:$0xff] %vm103, %v970
    %1052 = vst.msk [vmem:[#allocation4 + $0x78] sm:$0xff] %vm103, %v972
    %1053 = vst.msk [vmem:[#allocation4 + $0x80] sm:$0xff] %vm103, %v974
    %1054 = vst.msk [vmem:[#allocation4 + $0x88] sm:$0xff] %vm103, %v976
    %1055 = vst.msk [vmem:[#allocation4 + $0x90] sm:$0xff] %vm103, %v978
    %1056 = vst.msk [vmem:[#allocation4 + $0x98] sm:$0xff] %vm103, %v980
    %1057 = vst.msk [vmem:[#allocation4 + $0xa0] sm:$0xff] %vm103, %v982
    %1058 = vst.msk [vmem:[#allocation4 + $0xa8] sm:$0xff] %vm103, %v984
    %1059 = vst.msk [vmem:[#allocation4 + $0xb0] sm:$0xff] %vm103, %v986
    %1060 = vst.msk [vmem:[#allocation4 + $0xb8] sm:$0xff] %vm103, %v988
    %1061 = vst.msk [vmem:[#allocation4 + $0xc0] sm:$0xff] %vm103, %v990
    %1062 = vst.msk [vmem:[#allocation4 + $0xc8] sm:$0xff] %vm103, %v992
    %1063 = vst.msk [vmem:[#allocation4 + $0xd0] sm:$0xff] %vm103, %v994
    %1064 = vst.msk [vmem:[#allocation4 + $0xd8] sm:$0xff] %vm103, %v996
    %1065 = vst.msk [vmem:[#allocation4 + $0xe0] sm:$0xff] %vm103, %v998
    %1066 = vst.msk [vmem:[#allocation4 + $0xe8] sm:$0xff] %vm103, %v1000
    %1067 = vst.msk [vmem:[#allocation4 + $0xf0] sm:$0xff] %vm103, %v1002
    %1068 = vst.msk [vmem:[#allocation4 + $0xf8] sm:$0xff] %vm103, %v1004
    %v1069 = vlaneseq
    %v1070 = vshrl.u32 %v1069, 7
    %v1071 = vsub.s32 0, %v1070
    %v1072 = vrot.slane %v177, %v1071
    %s1074 = sor.u32 256, 96
    %1075 = vbcast.lane.b32.xlu0 %v1072, %s1074
    %v1076 = vpop.permute.xlu0 %1075
    %s1078 = sor.u32 256, 104
    %1079 = vbcast.lane.b32.xlu0 %v1072, %s1078
    %v1080 = vpop.permute.xlu0 %1079
    %v1081 = vlaneseq
    %v1082 = vshrl.u32 %v1081, 7
    %v1083 = vsub.s32 1, %v1082
    %v1084 = vrot.slane %v177, %v1083
    %s1086 = sor.u32 256, 96
    %1087 = vbcast.lane.b32.xlu0 %v1084, %s1086
    %v1088 = vpop.permute.xlu0 %1087
    %s1090 = sor.u32 256, 104
    %1091 = vbcast.lane.b32.xlu0 %v1084, %s1090
    %v1092 = vpop.permute.xlu0 %1091
    %v1093 = vlaneseq
    %v1094 = vshrl.u32 %v1093, 7
    %v1095 = vsub.s32 2, %v1094
    %v1096 = vrot.slane %v177, %v1095
    %s1098 = sor.u32 256, 96
    %1099 = vbcast.lane.b32.xlu0 %v1096, %s1098
    %v1100 = vpop.permute.xlu0 %1099
    %s1102 = sor.u32 256, 104
    %1103 = vbcast.lane.b32.xlu0 %v1096, %s1102
    %v1104 = vpop.permute.xlu0 %1103
    %v1105 = vlaneseq
    %v1106 = vshrl.u32 %v1105, 7
    %v1107 = vsub.s32 3, %v1106
    %v1108 = vrot.slane %v177, %v1107
    %s1110 = sor.u32 256, 96
    %1111 = vbcast.lane.b32.xlu0 %v1108, %s1110
    %v1112 = vpop.permute.xlu0 %1111
    %s1114 = sor.u32 256, 104
    %1115 = vbcast.lane.b32.xlu0 %v1108, %s1114
    %v1116 = vpop.permute.xlu0 %1115
    %v1117 = vlaneseq
    %v1118 = vshrl.u32 %v1117, 7
    %v1119 = vsub.s32 4, %v1118
    %v1120 = vrot.slane %v177, %v1119
    %s1122 = sor.u32 256, 96
    %1123 = vbcast.lane.b32.xlu0 %v1120, %s1122
    %v1124 = vpop.permute.xlu0 %1123
    %s1126 = sor.u32 256, 104
    %1127 = vbcast.lane.b32.xlu0 %v1120, %s1126
    %v1128 = vpop.permute.xlu0 %1127
    %v1129 = vlaneseq
    %v1130 = vshrl.u32 %v1129, 7
    %v1131 = vsub.s32 5, %v1130
    %v1132 = vrot.slane %v177, %v1131
    %s1134 = sor.u32 256, 96
    %1135 = vbcast.lane.b32.xlu0 %v1132, %s1134
    %v1136 = vpop.permute.xlu0 %1135
    %s1138 = sor.u32 256, 104
    %1139 = vbcast.lane.b32.xlu0 %v1132, %s1138
    %v1140 = vpop.permute.xlu0 %1139
    %v1141 = vlaneseq
    %v1142 = vshrl.u32 %v1141, 7
    %v1143 = vsub.s32 6, %v1142
    %v1144 = vrot.slane %v177, %v1143
    %s1146 = sor.u32 256, 96
    %1147 = vbcast.lane.b32.xlu0 %v1144, %s1146
    %v1148 = vpop.permute.xlu0 %1147
    %s1150 = sor.u32 256, 104
    %1151 = vbcast.lane.b32.xlu0 %v1144, %s1150
    %v1152 = vpop.permute.xlu0 %1151
    %v1153 = vlaneseq
    %v1154 = vshrl.u32 %v1153, 7
    %v1155 = vsub.s32 7, %v1154
    %v1156 = vrot.slane %v177, %v1155
    %s1158 = sor.u32 256, 96
    %1159 = vbcast.lane.b32.xlu0 %v1156, %s1158
    %v1160 = vpop.permute.xlu0 %1159
    %s1162 = sor.u32 256, 104
    %1163 = vbcast.lane.b32.xlu0 %v1156, %s1162
    %v1164 = vpop.permute.xlu0 %1163
    %v1165 = vlaneseq
    %v1166 = vshrl.u32 %v1165, 7
    %v1167 = vsub.s32 0, %v1166
    %v1168 = vrot.slane %v183, %v1167
    %s1170 = sor.u32 256, 96
    %1171 = vbcast.lane.b32.xlu0 %v1168, %s1170
    %v1172 = vpop.permute.xlu0 %1171
    %s1174 = sor.u32 256, 104
    %1175 = vbcast.lane.b32.xlu0 %v1168, %s1174
    %v1176 = vpop.permute.xlu0 %1175
    %v1177 = vlaneseq
    %v1178 = vshrl.u32 %v1177, 7
    %v1179 = vsub.s32 1, %v1178
    %v1180 = vrot.slane %v183, %v1179
    %s1182 = sor.u32 256, 96
    %1183 = vbcast.lane.b32.xlu0 %v1180, %s1182
    %v1184 = vpop.permute.xlu0 %1183
    %s1186 = sor.u32 256, 104
    %1187 = vbcast.lane.b32.xlu0 %v1180, %s1186
    %v1188 = vpop.permute.xlu0 %1187
    %v1189 = vlaneseq
    %v1190 = vshrl.u32 %v1189, 7
    %v1191 = vsub.s32 2, %v1190
    %v1192 = vrot.slane %v183, %v1191
    %s1194 = sor.u32 256, 96
    %1195 = vbcast.lane.b32.xlu0 %v1192, %s1194
    %v1196 = vpop.permute.xlu0 %1195
    %s1198 = sor.u32 256, 104
    %1199 = vbcast.lane.b32.xlu0 %v1192, %s1198
    %v1200 = vpop.permute.xlu0 %1199
    %v1201 = vlaneseq
    %v1202 = vshrl.u32 %v1201, 7
    %v1203 = vsub.s32 3, %v1202
    %v1204 = vrot.slane %v183, %v1203
    %s1206 = sor.u32 256, 96
    %1207 = vbcast.lane.b32.xlu0 %v1204, %s1206
    %v1208 = vpop.permute.xlu0 %1207
    %s1210 = sor.u32 256, 104
    %1211 = vbcast.lane.b32.xlu0 %v1204, %s1210
    %v1212 = vpop.permute.xlu0 %1211
    %v1213 = vlaneseq
    %v1214 = vshrl.u32 %v1213, 7
    %v1215 = vsub.s32 4, %v1214
    %v1216 = vrot.slane %v183, %v1215
    %s1218 = sor.u32 256, 96
    %1219 = vbcast.lane.b32.xlu0 %v1216, %s1218
    %v1220 = vpop.permute.xlu0 %1219
    %s1222 = sor.u32 256, 104
    %1223 = vbcast.lane.b32.xlu0 %v1216, %s1222
    %v1224 = vpop.permute.xlu0 %1223
    %v1225 = vlaneseq
    %v1226 = vshrl.u32 %v1225, 7
    %v1227 = vsub.s32 5, %v1226
    %v1228 = vrot.slane %v183, %v1227
    %s1230 = sor.u32 256, 96
    %1231 = vbcast.lane.b32.xlu0 %v1228, %s1230
    %v1232 = vpop.permute.xlu0 %1231
    %s1234 = sor.u32 256, 104
    %1235 = vbcast.lane.b32.xlu0 %v1228, %s1234
    %v1236 = vpop.permute.xlu0 %1235
    %v1237 = vlaneseq
    %v1238 = vshrl.u32 %v1237, 7
    %v1239 = vsub.s32 6, %v1238
    %v1240 = vrot.slane %v183, %v1239
    %s1242 = sor.u32 256, 96
    %1243 = vbcast.lane.b32.xlu0 %v1240, %s1242
    %v1244 = vpop.permute.xlu0 %1243
    %s1246 = sor.u32 256, 104
    %1247 = vbcast.lane.b32.xlu0 %v1240, %s1246
    %v1248 = vpop.permute.xlu0 %1247
    %v1249 = vlaneseq
    %v1250 = vshrl.u32 %v1249, 7
    %v1251 = vsub.s32 7, %v1250
    %v1252 = vrot.slane %v183, %v1251
    %s1254 = sor.u32 256, 96
    %1255 = vbcast.lane.b32.xlu0 %v1252, %s1254
    %v1256 = vpop.permute.xlu0 %1255
    %s1258 = sor.u32 256, 104
    %1259 = vbcast.lane.b32.xlu0 %v1252, %s1258
    %v1260 = vpop.permute.xlu0 %1259
    %v1261 = vmul.f32 %v877, %v1076
    %v1262 = vmul.f32 %v878, %v1080
    %v1263 = vmul.f32 %v879, %v1088
    %v1264 = vmul.f32 %v880, %v1092
    %v1265 = vmul.f32 %v881, %v1100
    %v1266 = vmul.f32 %v882, %v1104
    %v1267 = vmul.f32 %v883, %v1112
    %v1268 = vmul.f32 %v884, %v1116
    %v1269 = vmul.f32 %v885, %v1124
    %v1270 = vmul.f32 %v886, %v1128
    %v1271 = vmul.f32 %v887, %v1136
    %v1272 = vmul.f32 %v888, %v1140
    %v1273 = vmul.f32 %v889, %v1148
    %v1274 = vmul.f32 %v890, %v1152
    %v1275 = vmul.f32 %v891, %v1160
    %v1276 = vmul.f32 %v892, %v1164
    %v1277 = vmul.f32 %v893, %v1172
    %v1278 = vmul.f32 %v894, %v1176
    %v1279 = vmul.f32 %v895, %v1184
    %v1280 = vmul.f32 %v896, %v1188
    %v1281 = vmul.f32 %v897, %v1196
    %v1282 = vmul.f32 %v898, %v1200
    %v1283 = vmul.f32 %v899, %v1208
    %v1284 = vmul.f32 %v900, %v1212
    %v1285 = vmul.f32 %v901, %v1220
    %v1286 = vmul.f32 %v902, %v1224
    %v1287 = vmul.f32 %v903, %v1232
    %v1288 = vmul.f32 %v904, %v1236
    %v1289 = vmul.f32 %v905, %v1244
    %v1290 = vmul.f32 %v906, %v1248
    %v1291 = vmul.f32 %v907, %v1256
    %v1292 = vmul.f32 %v908, %v1260
    %v1295 = vcombine.high %v281, %v281
    %v1297 = vunpack.c.l.s4 1966171168
    %v1298 = vunpack.c.0.s8 %v1297
    %v1299 = vlaneseq
    %v1300 = vshrl.u32 %v1299, 7
    %v1301 = vsub.s32 %v1298, %v1300
    %v1302 = vrot.slane %v281, %v1301
    %v1304 = vunpack.c.l.s4 1966171168
    %v1305 = vunpack.c.0.s8 %v1304
    %v1306 = vlaneseq
    %v1307 = vshrl.u32 %v1306, 7
    %v1308 = vsub.s32 %v1305, %v1307
    %v1309 = vrot.slane %v1295, %v1308
    %v1310 = vcombine.high %v1302, %v1302
    %v1311 = vcombine.high %v1309, %v1309
    %v1313 = vunpack.c.l.s4 1966171168
    %v1314 = vunpack.c.0.s8 %v1313
    %v1315 = vlaneseq
    %v1316 = vshrl.u32 %v1315, 7
    %v1317 = vsub.s32 %v1314, %v1316
    %v1318 = vrot.slane %v1302, %v1317
    %v1320 = vunpack.c.l.s4 1966171168
    %v1321 = vunpack.c.0.s8 %v1320
    %v1322 = vlaneseq
    %v1323 = vshrl.u32 %v1322, 7
    %v1324 = vsub.s32 %v1321, %v1323
    %v1325 = vrot.slane %v1309, %v1324
    %v1327 = vunpack.c.l.s4 1966171168
    %v1328 = vunpack.c.0.s8 %v1327
    %v1329 = vlaneseq
    %v1330 = vshrl.u32 %v1329, 7
    %v1331 = vsub.s32 %v1328, %v1330
    %v1332 = vrot.slane %v1310, %v1331
    %v1334 = vunpack.c.l.s4 1966171168
    %v1335 = vunpack.c.0.s8 %v1334
    %v1336 = vlaneseq
    %v1337 = vshrl.u32 %v1336, 7
    %v1338 = vsub.s32 %v1335, %v1337
    %v1339 = vrot.slane %v1311, %v1338
    %v1340 = vcombine.high %v1318, %v1318
    %v1341 = vcombine.high %v1325, %v1325
    %v1342 = vcombine.high %v1332, %v1332
    %v1343 = vcombine.high %v1339, %v1339
    %v1344 = vcombine.high %v282, %v282
    %v1346 = vunpack.c.l.s4 1966171168
    %v1347 = vunpack.c.0.s8 %v1346
    %v1348 = vlaneseq
    %v1349 = vshrl.u32 %v1348, 7
    %v1350 = vsub.s32 %v1347, %v1349
    %v1351 = vrot.slane %v282, %v1350
    %v1353 = vunpack.c.l.s4 1966171168
    %v1354 = vunpack.c.0.s8 %v1353
    %v1355 = vlaneseq
    %v1356 = vshrl.u32 %v1355, 7
    %v1357 = vsub.s32 %v1354, %v1356
    %v1358 = vrot.slane %v1344, %v1357
    %v1359 = vcombine.high %v1351, %v1351
    %v1360 = vcombine.high %v1358, %v1358
    %v1362 = vunpack.c.l.s4 1966171168
    %v1363 = vunpack.c.0.s8 %v1362
    %v1364 = vlaneseq
    %v1365 = vshrl.u32 %v1364, 7
    %v1366 = vsub.s32 %v1363, %v1365
    %v1367 = vrot.slane %v1351, %v1366
    %v1369 = vunpack.c.l.s4 1966171168
    %v1370 = vunpack.c.0.s8 %v1369
    %v1371 = vlaneseq
    %v1372 = vshrl.u32 %v1371, 7
    %v1373 = vsub.s32 %v1370, %v1372
    %v1374 = vrot.slane %v1358, %v1373
    %v1376 = vunpack.c.l.s4 1966171168
    %v1377 = vunpack.c.0.s8 %v1376
    %v1378 = vlaneseq
    %v1379 = vshrl.u32 %v1378, 7
    %v1380 = vsub.s32 %v1377, %v1379
    %v1381 = vrot.slane %v1359, %v1380
    %v1383 = vunpack.c.l.s4 1966171168
    %v1384 = vunpack.c.0.s8 %v1383
    %v1385 = vlaneseq
    %v1386 = vshrl.u32 %v1385, 7
    %v1387 = vsub.s32 %v1384, %v1386
    %v1388 = vrot.slane %v1360, %v1387
    %v1389 = vcombine.high %v1367, %v1367
    %v1390 = vcombine.high %v1374, %v1374
    %v1391 = vcombine.high %v1381, %v1381
    %v1392 = vcombine.high %v1388, %v1388
    %v1393 = vlaneseq
    %v1394 = vshrl.u32 %v1393, 7
    %v1395 = vsub.s32 0, %v1394
    %v1396 = vrot.slane %v1318, %v1395
    %v1397 = vlaneseq
    %v1398 = vshrl.u32 %v1397, 7
    %v1399 = vsub.s32 0, %v1398
    %v1400 = vrot.slane %v1332, %v1399
    %v1401 = vlaneseq
    %v1402 = vshrl.u32 %v1401, 7
    %v1403 = vsub.s32 0, %v1402
    %v1404 = vrot.slane %v1340, %v1403
    %v1405 = vlaneseq
    %v1406 = vshrl.u32 %v1405, 7
    %v1407 = vsub.s32 0, %v1406
    %v1408 = vrot.slane %v1342, %v1407
    %v1409 = vlaneseq
    %v1410 = vshrl.u32 %v1409, 7
    %v1411 = vsub.s32 0, %v1410
    %v1412 = vrot.slane %v1325, %v1411
    %v1413 = vlaneseq
    %v1414 = vshrl.u32 %v1413, 7
    %v1415 = vsub.s32 0, %v1414
    %v1416 = vrot.slane %v1339, %v1415
    %v1417 = vlaneseq
    %v1418 = vshrl.u32 %v1417, 7
    %v1419 = vsub.s32 0, %v1418
    %v1420 = vrot.slane %v1341, %v1419
    %v1421 = vlaneseq
    %v1422 = vshrl.u32 %v1421, 7
    %v1423 = vsub.s32 0, %v1422
    %v1424 = vrot.slane %v1343, %v1423
    %v1425 = vlaneseq
    %v1426 = vshrl.u32 %v1425, 7
    %v1427 = vsub.s32 0, %v1426
    %v1428 = vrot.slane %v1367, %v1427
    %v1429 = vlaneseq
    %v1430 = vshrl.u32 %v1429, 7
    %v1431 = vsub.s32 0, %v1430
    %v1432 = vrot.slane %v1381, %v1431
    %v1433 = vlaneseq
    %v1434 = vshrl.u32 %v1433, 7
    %v1435 = vsub.s32 0, %v1434
    %v1436 = vrot.slane %v1389, %v1435
    %v1437 = vlaneseq
    %v1438 = vshrl.u32 %v1437, 7
    %v1439 = vsub.s32 0, %v1438
    %v1440 = vrot.slane %v1391, %v1439
    %v1441 = vlaneseq
    %v1442 = vshrl.u32 %v1441, 7
    %v1443 = vsub.s32 0, %v1442
    %v1444 = vrot.slane %v1374, %v1443
    %v1445 = vlaneseq
    %v1446 = vshrl.u32 %v1445, 7
    %v1447 = vsub.s32 0, %v1446
    %v1448 = vrot.slane %v1388, %v1447
    %v1449 = vlaneseq
    %v1450 = vshrl.u32 %v1449, 7
    %v1451 = vsub.s32 0, %v1450
    %v1452 = vrot.slane %v1390, %v1451
    %v1453 = vlaneseq
    %v1454 = vshrl.u32 %v1453, 7
    %v1455 = vsub.s32 0, %v1454
    %v1456 = vrot.slane %v1392, %v1455
    %1457 = vrot.lane.b32.xlu0 %v1396, 64
    %v1458 = vpop.permute.xlu0 %1457
    %1459 = vrot.lane.b32.xlu0 %v1400, 64
    %v1460 = vpop.permute.xlu0 %1459
    %1461 = vrot.lane.b32.xlu0 %v1404, 64
    %v1462 = vpop.permute.xlu0 %1461
    %1463 = vrot.lane.b32.xlu0 %v1408, 64
    %v1464 = vpop.permute.xlu0 %1463
    %1465 = vrot.lane.b32.xlu0 %v1412, 64
    %v1466 = vpop.permute.xlu0 %1465
    %1467 = vrot.lane.b32.xlu0 %v1416, 64
    %v1468 = vpop.permute.xlu0 %1467
    %1469 = vrot.lane.b32.xlu0 %v1420, 64
    %v1470 = vpop.permute.xlu0 %1469
    %1471 = vrot.lane.b32.xlu0 %v1424, 64
    %v1472 = vpop.permute.xlu0 %1471
    %1473 = vrot.lane.b32.xlu0 %v1428, 64
    %v1474 = vpop.permute.xlu0 %1473
    %1475 = vrot.lane.b32.xlu0 %v1432, 64
    %v1476 = vpop.permute.xlu0 %1475
    %1477 = vrot.lane.b32.xlu0 %v1436, 64
    %v1478 = vpop.permute.xlu0 %1477
    %1479 = vrot.lane.b32.xlu0 %v1440, 64
    %v1480 = vpop.permute.xlu0 %1479
    %1481 = vrot.lane.b32.xlu0 %v1444, 64
    %v1482 = vpop.permute.xlu0 %1481
    %1483 = vrot.lane.b32.xlu0 %v1448, 64
    %v1484 = vpop.permute.xlu0 %1483
    %1485 = vrot.lane.b32.xlu0 %v1452, 64
    %v1486 = vpop.permute.xlu0 %1485
    %1487 = vrot.lane.b32.xlu0 %v1456, 64
    %v1488 = vpop.permute.xlu0 %1487
    %v1505 = vmul.f32 %v1261, %v1458
    %v1506 = vmul.f32 %v1262, %v1458
    %v1507 = vmul.f32 %v1263, %v1460
    %v1508 = vmul.f32 %v1264, %v1460
    %v1509 = vmul.f32 %v1265, %v1462
    %v1510 = vmul.f32 %v1266, %v1462
    %v1511 = vmul.f32 %v1267, %v1464
    %v1512 = vmul.f32 %v1268, %v1464
    %v1513 = vmul.f32 %v1269, %v1466
    %v1514 = vmul.f32 %v1270, %v1466
    %v1515 = vmul.f32 %v1271, %v1468
    %v1516 = vmul.f32 %v1272, %v1468
    %v1517 = vmul.f32 %v1273, %v1470
    %v1518 = vmul.f32 %v1274, %v1470
    %v1519 = vmul.f32 %v1275, %v1472
    %v1520 = vmul.f32 %v1276, %v1472
    %v1521 = vmul.f32 %v1277, %v1474
    %v1522 = vmul.f32 %v1278, %v1474
    %v1523 = vmul.f32 %v1279, %v1476
    %v1524 = vmul.f32 %v1280, %v1476
    %v1525 = vmul.f32 %v1281, %v1478
    %v1526 = vmul.f32 %v1282, %v1478
    %v1527 = vmul.f32 %v1283, %v1480
    %v1528 = vmul.f32 %v1284, %v1480
    %v1529 = vmul.f32 %v1285, %v1482
    %v1530 = vmul.f32 %v1286, %v1482
    %v1531 = vmul.f32 %v1287, %v1484
    %v1532 = vmul.f32 %v1288, %v1484
    %v1533 = vmul.f32 %v1289, %v1486
    %v1534 = vmul.f32 %v1290, %v1486
    %v1535 = vmul.f32 %v1291, %v1488
    %v1536 = vmul.f32 %v1292, %v1488
    %1569 = vrot.lane.b32.xlu0 %v1505, 64
    %v1570 = vpop.permute.xlu0 %1569
    %1571 = vrot.lane.b32.xlu0 %v1506, 64
    %v1572 = vpop.permute.xlu0 %1571
    %1573 = vrot.lane.b32.xlu0 %v1507, 64
    %v1574 = vpop.permute.xlu0 %1573
    %1575 = vrot.lane.b32.xlu0 %v1508, 64
    %v1576 = vpop.permute.xlu0 %1575
    %1577 = vrot.lane.b32.xlu0 %v1509, 64
    %v1578 = vpop.permute.xlu0 %1577
    %1579 = vrot.lane.b32.xlu0 %v1510, 64
    %v1580 = vpop.permute.xlu0 %1579
    %1581 = vrot.lane.b32.xlu0 %v1511, 64
    %v1582 = vpop.permute.xlu0 %1581
    %1583 = vrot.lane.b32.xlu0 %v1512, 64
    %v1584 = vpop.permute.xlu0 %1583
    %1585 = vrot.lane.b32.xlu0 %v1513, 64
    %v1586 = vpop.permute.xlu0 %1585
    %1587 = vrot.lane.b32.xlu0 %v1514, 64
    %v1588 = vpop.permute.xlu0 %1587
    %1589 = vrot.lane.b32.xlu0 %v1515, 64
    %v1590 = vpop.permute.xlu0 %1589
    %1591 = vrot.lane.b32.xlu0 %v1516, 64
    %v1592 = vpop.permute.xlu0 %1591
    %1593 = vrot.lane.b32.xlu0 %v1517, 64
    %v1594 = vpop.permute.xlu0 %1593
    %1595 = vrot.lane.b32.xlu0 %v1518, 64
    %v1596 = vpop.permute.xlu0 %1595
    %1597 = vrot.lane.b32.xlu0 %v1519, 64
    %v1598 = vpop.permute.xlu0 %1597
    %1599 = vrot.lane.b32.xlu0 %v1520, 64
    %v1600 = vpop.permute.xlu0 %1599
    %1601 = vrot.lane.b32.xlu0 %v1521, 64
    %v1602 = vpop.permute.xlu0 %1601
    %1603 = vrot.lane.b32.xlu0 %v1522, 64
    %v1604 = vpop.permute.xlu0 %1603
    %1605 = vrot.lane.b32.xlu0 %v1523, 64
    %v1606 = vpop.permute.xlu0 %1605
    %1607 = vrot.lane.b32.xlu0 %v1524, 64
    %v1608 = vpop.permute.xlu0 %1607
    %1609 = vrot.lane.b32.xlu0 %v1525, 64
    %v1610 = vpop.permute.xlu0 %1609
    %1611 = vrot.lane.b32.xlu0 %v1526, 64
    %v1612 = vpop.permute.xlu0 %1611
    %1613 = vrot.lane.b32.xlu0 %v1527, 64
    %v1614 = vpop.permute.xlu0 %1613
    %1615 = vrot.lane.b32.xlu0 %v1528, 64
    %v1616 = vpop.permute.xlu0 %1615
    %1617 = vrot.lane.b32.xlu0 %v1529, 64
    %v1618 = vpop.permute.xlu0 %1617
    %1619 = vrot.lane.b32.xlu0 %v1530, 64
    %v1620 = vpop.permute.xlu0 %1619
    %1621 = vrot.lane.b32.xlu0 %v1531, 64
    %v1622 = vpop.permute.xlu0 %1621
    %1623 = vrot.lane.b32.xlu0 %v1532, 64
    %v1624 = vpop.permute.xlu0 %1623
    %1625 = vrot.lane.b32.xlu0 %v1533, 64
    %v1626 = vpop.permute.xlu0 %1625
    %1627 = vrot.lane.b32.xlu0 %v1534, 64
    %v1628 = vpop.permute.xlu0 %1627
    %1629 = vrot.lane.b32.xlu0 %v1535, 64
    %v1630 = vpop.permute.xlu0 %1629
    %1631 = vrot.lane.b32.xlu0 %v1536, 64
    %v1632 = vpop.permute.xlu0 %1631
    %1665 = vst.msk [vmem:[#allocation5] sm:$0xff] %vm103, %v1570
    %1666 = vst.msk [vmem:[#allocation5 + $0x8] sm:$0xff] %vm103, %v1572
    %1667 = vst.msk [vmem:[#allocation5 + $0x10] sm:$0xff] %vm103, %v1574
    %1668 = vst.msk [vmem:[#allocation5 + $0x18] sm:$0xff] %vm103, %v1576
    %1669 = vst.msk [vmem:[#allocation5 + $0x20] sm:$0xff] %vm103, %v1578
    %1670 = vst.msk [vmem:[#allocation5 + $0x28] sm:$0xff] %vm103, %v1580
    %1671 = vst.msk [vmem:[#allocation5 + $0x30] sm:$0xff] %vm103, %v1582
    %1672 = vst.msk [vmem:[#allocation5 + $0x38] sm:$0xff] %vm103, %v1584
    %1673 = vst.msk [vmem:[#allocation5 + $0x40] sm:$0xff] %vm103, %v1586
    %1674 = vst.msk [vmem:[#allocation5 + $0x48] sm:$0xff] %vm103, %v1588
    %1675 = vst.msk [vmem:[#allocation5 + $0x50] sm:$0xff] %vm103, %v1590
    %1676 = vst.msk [vmem:[#allocation5 + $0x58] sm:$0xff] %vm103, %v1592
    %1677 = vst.msk [vmem:[#allocation5 + $0x60] sm:$0xff] %vm103, %v1594
    %1678 = vst.msk [vmem:[#allocation5 + $0x68] sm:$0xff] %vm103, %v1596
    %1679 = vst.msk [vmem:[#allocation5 + $0x70] sm:$0xff] %vm103, %v1598
    %1680 = vst.msk [vmem:[#allocation5 + $0x78] sm:$0xff] %vm103, %v1600
    %1681 = vst.msk [vmem:[#allocation5 + $0x80] sm:$0xff] %vm103, %v1602
    %1682 = vst.msk [vmem:[#allocation5 + $0x88] sm:$0xff] %vm103, %v1604
    %1683 = vst.msk [vmem:[#allocation5 + $0x90] sm:$0xff] %vm103, %v1606
    %1684 = vst.msk [vmem:[#allocation5 + $0x98] sm:$0xff] %vm103, %v1608
    %1685 = vst.msk [vmem:[#allocation5 + $0xa0] sm:$0xff] %vm103, %v1610
    %1686 = vst.msk [vmem:[#allocation5 + $0xa8] sm:$0xff] %vm103, %v1612
    %1687 = vst.msk [vmem:[#allocation5 + $0xb0] sm:$0xff] %vm103, %v1614
    %1688 = vst.msk [vmem:[#allocation5 + $0xb8] sm:$0xff] %vm103, %v1616
    %1689 = vst.msk [vmem:[#allocation5 + $0xc0] sm:$0xff] %vm103, %v1618
    %1690 = vst.msk [vmem:[#allocation5 + $0xc8] sm:$0xff] %vm103, %v1620
    %1691 = vst.msk [vmem:[#allocation5 + $0xd0] sm:$0xff] %vm103, %v1622
    %1692 = vst.msk [vmem:[#allocation5 + $0xd8] sm:$0xff] %vm103, %v1624
    %1693 = vst.msk [vmem:[#allocation5 + $0xe0] sm:$0xff] %vm103, %v1626
    %1694 = vst.msk [vmem:[#allocation5 + $0xe8] sm:$0xff] %vm103, %v1628
    %1695 = vst.msk [vmem:[#allocation5 + $0xf0] sm:$0xff] %vm103, %v1630
    %1696 = vst.msk [vmem:[#allocation5 + $0xf8] sm:$0xff] %vm103, %v1632
    %v1697 = vlaneseq
    %v1698 = vshrl.u32 %v1697, 7
    %v1699 = vsub.s32 0, %v1698
    %v1700 = vrot.slane %v179, %v1699
    %s1702 = sor.u32 256, 96
    %1703 = vbcast.lane.b32.xlu0 %v1700, %s1702
    %v1704 = vpop.permute.xlu0 %1703
    %s1706 = sor.u32 256, 104
    %1707 = vbcast.lane.b32.xlu0 %v1700, %s1706
    %v1708 = vpop.permute.xlu0 %1707
    %v1709 = vlaneseq
    %v1710 = vshrl.u32 %v1709, 7
    %v1711 = vsub.s32 1, %v1710
    %v1712 = vrot.slane %v179, %v1711
    %s1714 = sor.u32 256, 96
    %1715 = vbcast.lane.b32.xlu0 %v1712, %s1714
    %v1716 = vpop.permute.xlu0 %1715
    %s1718 = sor.u32 256, 104
    %1719 = vbcast.lane.b32.xlu0 %v1712, %s1718
    %v1720 = vpop.permute.xlu0 %1719
    %v1721 = vlaneseq
    %v1722 = vshrl.u32 %v1721, 7
    %v1723 = vsub.s32 2, %v1722
    %v1724 = vrot.slane %v179, %v1723
    %s1726 = sor.u32 256, 96
    %1727 = vbcast.lane.b32.xlu0 %v1724, %s1726
    %v1728 = vpop.permute.xlu0 %1727
    %s1730 = sor.u32 256, 104
    %1731 = vbcast.lane.b32.xlu0 %v1724, %s1730
    %v1732 = vpop.permute.xlu0 %1731
    %v1733 = vlaneseq
    %v1734 = vshrl.u32 %v1733, 7
    %v1735 = vsub.s32 3, %v1734
    %v1736 = vrot.slane %v179, %v1735
    %s1738 = sor.u32 256, 96
    %1739 = vbcast.lane.b32.xlu0 %v1736, %s1738
    %v1740 = vpop.permute.xlu0 %1739
    %s1742 = sor.u32 256, 104
    %1743 = vbcast.lane.b32.xlu0 %v1736, %s1742
    %v1744 = vpop.permute.xlu0 %1743
    %v1745 = vlaneseq
    %v1746 = vshrl.u32 %v1745, 7
    %v1747 = vsub.s32 4, %v1746
    %v1748 = vrot.slane %v179, %v1747
    %s1750 = sor.u32 256, 96
    %1751 = vbcast.lane.b32.xlu0 %v1748, %s1750
    %v1752 = vpop.permute.xlu0 %1751
    %s1754 = sor.u32 256, 104
    %1755 = vbcast.lane.b32.xlu0 %v1748, %s1754
    %v1756 = vpop.permute.xlu0 %1755
    %v1757 = vlaneseq
    %v1758 = vshrl.u32 %v1757, 7
    %v1759 = vsub.s32 5, %v1758
    %v1760 = vrot.slane %v179, %v1759
    %s1762 = sor.u32 256, 96
    %1763 = vbcast.lane.b32.xlu0 %v1760, %s1762
    %v1764 = vpop.permute.xlu0 %1763
    %s1766 = sor.u32 256, 104
    %1767 = vbcast.lane.b32.xlu0 %v1760, %s1766
    %v1768 = vpop.permute.xlu0 %1767
    %v1769 = vlaneseq
    %v1770 = vshrl.u32 %v1769, 7
    %v1771 = vsub.s32 6, %v1770
    %v1772 = vrot.slane %v179, %v1771
    %s1774 = sor.u32 256, 96
    %1775 = vbcast.lane.b32.xlu0 %v1772, %s1774
    %v1776 = vpop.permute.xlu0 %1775
    %s1778 = sor.u32 256, 104
    %1779 = vbcast.lane.b32.xlu0 %v1772, %s1778
    %v1780 = vpop.permute.xlu0 %1779
    %v1781 = vlaneseq
    %v1782 = vshrl.u32 %v1781, 7
    %v1783 = vsub.s32 7, %v1782
    %v1784 = vrot.slane %v179, %v1783
    %s1786 = sor.u32 256, 96
    %1787 = vbcast.lane.b32.xlu0 %v1784, %s1786
    %v1788 = vpop.permute.xlu0 %1787
    %s1790 = sor.u32 256, 104
    %1791 = vbcast.lane.b32.xlu0 %v1784, %s1790
    %v1792 = vpop.permute.xlu0 %1791
    %v1793 = vlaneseq
    %v1794 = vshrl.u32 %v1793, 7
    %v1795 = vsub.s32 0, %v1794
    %v1796 = vrot.slane %v185, %v1795
    %s1798 = sor.u32 256, 96
    %1799 = vbcast.lane.b32.xlu0 %v1796, %s1798
    %v1800 = vpop.permute.xlu0 %1799
    %s1802 = sor.u32 256, 104
    %1803 = vbcast.lane.b32.xlu0 %v1796, %s1802
    %v1804 = vpop.permute.xlu0 %1803
    %v1805 = vlaneseq
    %v1806 = vshrl.u32 %v1805, 7
    %v1807 = vsub.s32 1, %v1806
    %v1808 = vrot.slane %v185, %v1807
    %s1810 = sor.u32 256, 96
    %1811 = vbcast.lane.b32.xlu0 %v1808, %s1810
    %v1812 = vpop.permute.xlu0 %1811
    %s1814 = sor.u32 256, 104
    %1815 = vbcast.lane.b32.xlu0 %v1808, %s1814
    %v1816 = vpop.permute.xlu0 %1815
    %v1817 = vlaneseq
    %v1818 = vshrl.u32 %v1817, 7
    %v1819 = vsub.s32 2, %v1818
    %v1820 = vrot.slane %v185, %v1819
    %s1822 = sor.u32 256, 96
    %1823 = vbcast.lane.b32.xlu0 %v1820, %s1822
    %v1824 = vpop.permute.xlu0 %1823
    %s1826 = sor.u32 256, 104
    %1827 = vbcast.lane.b32.xlu0 %v1820, %s1826
    %v1828 = vpop.permute.xlu0 %1827
    %v1829 = vlaneseq
    %v1830 = vshrl.u32 %v1829, 7
    %v1831 = vsub.s32 3, %v1830
    %v1832 = vrot.slane %v185, %v1831
    %s1834 = sor.u32 256, 96
    %1835 = vbcast.lane.b32.xlu0 %v1832, %s1834
    %v1836 = vpop.permute.xlu0 %1835
    %s1838 = sor.u32 256, 104
    %1839 = vbcast.lane.b32.xlu0 %v1832, %s1838
    %v1840 = vpop.permute.xlu0 %1839
    %v1841 = vlaneseq
    %v1842 = vshrl.u32 %v1841, 7
    %v1843 = vsub.s32 4, %v1842
    %v1844 = vrot.slane %v185, %v1843
    %s1846 = sor.u32 256, 96
    %1847 = vbcast.lane.b32.xlu0 %v1844, %s1846
    %v1848 = vpop.permute.xlu0 %1847
    %s1850 = sor.u32 256, 104
    %1851 = vbcast.lane.b32.xlu0 %v1844, %s1850
    %v1852 = vpop.permute.xlu0 %1851
    %v1853 = vlaneseq
    %v1854 = vshrl.u32 %v1853, 7
    %v1855 = vsub.s32 5, %v1854
    %v1856 = vrot.slane %v185, %v1855
    %s1858 = sor.u32 256, 96
    %1859 = vbcast.lane.b32.xlu0 %v1856, %s1858
    %v1860 = vpop.permute.xlu0 %1859
    %s1862 = sor.u32 256, 104
    %1863 = vbcast.lane.b32.xlu0 %v1856, %s1862
    %v1864 = vpop.permute.xlu0 %1863
    %v1865 = vlaneseq
    %v1866 = vshrl.u32 %v1865, 7
    %v1867 = vsub.s32 6, %v1866
    %v1868 = vrot.slane %v185, %v1867
    %s1870 = sor.u32 256, 96
    %1871 = vbcast.lane.b32.xlu0 %v1868, %s1870
    %v1872 = vpop.permute.xlu0 %1871
    %s1874 = sor.u32 256, 104
    %1875 = vbcast.lane.b32.xlu0 %v1868, %s1874
    %v1876 = vpop.permute.xlu0 %1875
    %v1877 = vlaneseq
    %v1878 = vshrl.u32 %v1877, 7
    %v1879 = vsub.s32 7, %v1878
    %v1880 = vrot.slane %v185, %v1879
    %s1882 = sor.u32 256, 96
    %1883 = vbcast.lane.b32.xlu0 %v1880, %s1882
    %v1884 = vpop.permute.xlu0 %1883
    %s1886 = sor.u32 256, 104
    %1887 = vbcast.lane.b32.xlu0 %v1880, %s1886
    %v1888 = vpop.permute.xlu0 %1887
    %1889 = vst.msk [vmem:[#allocation6] sm:$0xff] %vm103, %v1704
    %1890 = vst.msk [vmem:[#allocation6 + $0x8] sm:$0xff] %vm103, %v1708
    %1891 = vst.msk [vmem:[#allocation6 + $0x10] sm:$0xff] %vm103, %v1716
    %1892 = vst.msk [vmem:[#allocation6 + $0x18] sm:$0xff] %vm103, %v1720
    %1893 = vst.msk [vmem:[#allocation6 + $0x20] sm:$0xff] %vm103, %v1728
    %1894 = vst.msk [vmem:[#allocation6 + $0x28] sm:$0xff] %vm103, %v1732
    %1895 = vst.msk [vmem:[#allocation6 + $0x30] sm:$0xff] %vm103, %v1740
    %1896 = vst.msk [vmem:[#allocation6 + $0x38] sm:$0xff] %vm103, %v1744
    %1897 = vst.msk [vmem:[#allocation6 + $0x40] sm:$0xff] %vm103, %v1752
    %1898 = vst.msk [vmem:[#allocation6 + $0x48] sm:$0xff] %vm103, %v1756
    %1899 = vst.msk [vmem:[#allocation6 + $0x50] sm:$0xff] %vm103, %v1764
    %1900 = vst.msk [vmem:[#allocation6 + $0x58] sm:$0xff] %vm103, %v1768
    %1901 = vst.msk [vmem:[#allocation6 + $0x60] sm:$0xff] %vm103, %v1776
    %1902 = vst.msk [vmem:[#allocation6 + $0x68] sm:$0xff] %vm103, %v1780
    %1903 = vst.msk [vmem:[#allocation6 + $0x70] sm:$0xff] %vm103, %v1788
    %1904 = vst.msk [vmem:[#allocation6 + $0x78] sm:$0xff] %vm103, %v1792
    %1905 = vst.msk [vmem:[#allocation6 + $0x80] sm:$0xff] %vm103, %v1800
    %1906 = vst.msk [vmem:[#allocation6 + $0x88] sm:$0xff] %vm103, %v1804
    %1907 = vst.msk [vmem:[#allocation6 + $0x90] sm:$0xff] %vm103, %v1812
    %1908 = vst.msk [vmem:[#allocation6 + $0x98] sm:$0xff] %vm103, %v1816
    %1909 = vst.msk [vmem:[#allocation6 + $0xa0] sm:$0xff] %vm103, %v1824
    %1910 = vst.msk [vmem:[#allocation6 + $0xa8] sm:$0xff] %vm103, %v1828
    %1911 = vst.msk [vmem:[#allocation6 + $0xb0] sm:$0xff] %vm103, %v1836
    %1912 = vst.msk [vmem:[#allocation6 + $0xb8] sm:$0xff] %vm103, %v1840
    %1913 = vst.msk [vmem:[#allocation6 + $0xc0] sm:$0xff] %vm103, %v1848
    %1914 = vst.msk [vmem:[#allocation6 + $0xc8] sm:$0xff] %vm103, %v1852
    %1915 = vst.msk [vmem:[#allocation6 + $0xd0] sm:$0xff] %vm103, %v1860
    %1916 = vst.msk [vmem:[#allocation6 + $0xd8] sm:$0xff] %vm103, %v1864
    %1917 = vst.msk [vmem:[#allocation6 + $0xe0] sm:$0xff] %vm103, %v1872
    %1918 = vst.msk [vmem:[#allocation6 + $0xe8] sm:$0xff] %vm103, %v1876
    %1919 = vst.msk [vmem:[#allocation6 + $0xf0] sm:$0xff] %vm103, %v1884
    %1920 = vst.msk [vmem:[#allocation6 + $0xf8] sm:$0xff] %vm103, %v1888
    %v1921 = vld [vmem:[#allocation2] sm:$0xff]
    %v1922 = vld [vmem:[#allocation2 + $0x8] sm:$0xff]
    %v1923 = vld [vmem:[#allocation2 + $0x10] sm:$0xff]
    %v1924 = vld [vmem:[#allocation2 + $0x18] sm:$0xff]
    %s1925 = smul.u32 0, 16
    %s1926 = scalar_lea.vmem [#allocation4], %s1925
    %v1927 = vld [vmem:[%s1926] sm:$0xff]
    %v1928 = vld [vmem:[%s1926 + $0x8] sm:$0xff]
    %v1929 = vld [vmem:[%s1926 + $0x10] sm:$0xff]
    %v1930 = vld [vmem:[%s1926 + $0x18] sm:$0xff]
    %v1931 = vmul.f32 %v1927, %v1921
    %v1932 = vmul.f32 %v1928, %v1922
    %v1933 = vmul.f32 %v1929, %v1923
    %v1934 = vmul.f32 %v1930, %v1924
    %s1935 = scalar_lea.vmem [#allocation5], %s1925
    %v1936 = vld [vmem:[%s1935] sm:$0xff]
    %v1937 = vld [vmem:[%s1935 + $0x8] sm:$0xff]
    %v1938 = vld [vmem:[%s1935 + $0x10] sm:$0xff]
    %v1939 = vld [vmem:[%s1935 + $0x18] sm:$0xff]
    %v1940 = vadd.f32 %v1931, %v1936
    %v1941 = vadd.f32 %v1932, %v1937
    %v1942 = vadd.f32 %v1933, %v1938
    %v1943 = vadd.f32 %v1934, %v1939
    %s1944 = scalar_lea.vmem [#allocation6], %s1925
    %v1945 = vld [vmem:[%s1944] sm:$0xff]
    %v1946 = vld [vmem:[%s1944 + $0x8] sm:$0xff]
    %v1947 = vld [vmem:[%s1944 + $0x10] sm:$0xff]
    %v1948 = vld [vmem:[%s1944 + $0x18] sm:$0xff]
    %v1949 = vmul.f32 %v1945, %v1940
    %v1950 = vmul.f32 %v1946, %v1941
    %v1951 = vmul.f32 %v1947, %v1942
    %v1952 = vmul.f32 %v1948, %v1943
    %v1953 = vsel %vm103, %v1949, 0.0
    %v1954 = vsel %vm103, %v1950, 0.0
    %v1955 = vadd.f32 %v1953, %v1954
    %v1956 = vrot.slane %v1955, 4
    %v1957 = vadd.f32 %v1955, %v1956
    %v1958 = vrot.slane %v1957, 2
    %v1959 = vadd.f32 %v1957, %v1958
    %v1960 = vrot.slane %v1959, 1
    %v1961 = vadd.f32 %v1959, %v1960
    %v1962 = vsel %vm103, %v1951, 0.0
    %v1963 = vsel %vm103, %v1952, 0.0
    %v1964 = vadd.f32 %v1962, %v1963
    %v1965 = vrot.slane %v1964, 4
    %v1966 = vadd.f32 %v1964, %v1965
    %v1967 = vrot.slane %v1966, 2
    %v1968 = vadd.f32 %v1966, %v1967
    %v1969 = vrot.slane %v1968, 1
    %v1970 = vadd.f32 %v1968, %v1969
    %vm1973 = vcmask 1041409
    %v1974 = vsel %vm1973, %v1970, %v1961
    %vm1976 = vcmask 254976
    %1977 = vst.msk [vmem:[#allocation7] sm:$0x3] %vm1976, %v1974
    %s1978 = smul.u32 2, 16
    %s1979 = scalar_lea.vmem [#allocation4], %s1978
    %v1980 = vld [vmem:[%s1979] sm:$0xff]
    %v1981 = vld [vmem:[%s1979 + $0x8] sm:$0xff]
    %v1982 = vld [vmem:[%s1979 + $0x10] sm:$0xff]
    %v1983 = vld [vmem:[%s1979 + $0x18] sm:$0xff]
    %v1984 = vmul.f32 %v1980, %v1940
    %v1985 = vmul.f32 %v1981, %v1941
    %v1986 = vmul.f32 %v1982, %v1942
    %v1987 = vmul.f32 %v1983, %v1943
    %s1988 = scalar_lea.vmem [#allocation5], %s1978
    %v1989 = vld [vmem:[%s1988] sm:$0xff]
    %v1990 = vld [vmem:[%s1988 + $0x8] sm:$0xff]
    %v1991 = vld [vmem:[%s1988 + $0x10] sm:$0xff]
    %v1992 = vld [vmem:[%s1988 + $0x18] sm:$0xff]
    %v1993 = vadd.f32 %v1984, %v1989
    %v1994 = vadd.f32 %v1985, %v1990
    %v1995 = vadd.f32 %v1986, %v1991
    %v1996 = vadd.f32 %v1987, %v1992
    %s1997 = scalar_lea.vmem [#allocation6], %s1978
    %v1998 = vld [vmem:[%s1997] sm:$0xff]
    %v1999 = vld [vmem:[%s1997 + $0x8] sm:$0xff]
    %v2000 = vld [vmem:[%s1997 + $0x10] sm:$0xff]
    %v2001 = vld [vmem:[%s1997 + $0x18] sm:$0xff]
    %v2002 = vmul.f32 %v1998, %v1993
    %v2003 = vmul.f32 %v1999, %v1994
    %v2004 = vmul.f32 %v2000, %v1995
    %v2005 = vmul.f32 %v2001, %v1996
    %v2006 = vsel %vm103, %v2002, 0.0
    %v2007 = vsel %vm103, %v2003, 0.0
    %v2008 = vadd.f32 %v2006, %v2007
    %v2009 = vrot.slane %v2008, 4
    %v2010 = vadd.f32 %v2008, %v2009
    %v2011 = vrot.slane %v2010, 2
    %v2012 = vadd.f32 %v2010, %v2011
    %v2013 = vrot.slane %v2012, 1
    %v2014 = vadd.f32 %v2012, %v2013
    %v2015 = vsel %vm103, %v2004, 0.0
    %v2016 = vsel %vm103, %v2005, 0.0
    %v2017 = vadd.f32 %v2015, %v2016
    %v2018 = vrot.slane %v2017, 4
    %v2019 = vadd.f32 %v2017, %v2018
    %v2020 = vrot.slane %v2019, 2
    %v2021 = vadd.f32 %v2019, %v2020
    %v2022 = vrot.slane %v2021, 1
    %v2023 = vadd.f32 %v2021, %v2022
    %v2026 = vsel %vm1973, %v2023, %v2014
    %s2028 = scalar_lea.vmem [#allocation7], 2
    %2029 = vst.msk [vmem:[%s2028] sm:$0x3] %vm1976, %v2026
    %s2030 = smul.u32 4, 16
    %s2031 = scalar_lea.vmem [#allocation4], %s2030
    %v2032 = vld [vmem:[%s2031] sm:$0xff]
    %v2033 = vld [vmem:[%s2031 + $0x8] sm:$0xff]
    %v2034 = vld [vmem:[%s2031 + $0x10] sm:$0xff]
    %v2035 = vld [vmem:[%s2031 + $0x18] sm:$0xff]
    %v2036 = vmul.f32 %v2032, %v1993
    %v2037 = vmul.f32 %v2033, %v1994
    %v2038 = vmul.f32 %v2034, %v1995
    %v2039 = vmul.f32 %v2035, %v1996
    %s2040 = scalar_lea.vmem [#allocation5], %s2030
    %v2041 = vld [vmem:[%s2040] sm:$0xff]
    %v2042 = vld [vmem:[%s2040 + $0x8] sm:$0xff]
    %v2043 = vld [vmem:[%s2040 + $0x10] sm:$0xff]
    %v2044 = vld [vmem:[%s2040 + $0x18] sm:$0xff]
    %v2045 = vadd.f32 %v2036, %v2041
    %v2046 = vadd.f32 %v2037, %v2042
    %v2047 = vadd.f32 %v2038, %v2043
    %v2048 = vadd.f32 %v2039, %v2044
    %s2049 = scalar_lea.vmem [#allocation6], %s2030
    %v2050 = vld [vmem:[%s2049] sm:$0xff]
    %v2051 = vld [vmem:[%s2049 + $0x8] sm:$0xff]
    %v2052 = vld [vmem:[%s2049 + $0x10] sm:$0xff]
    %v2053 = vld [vmem:[%s2049 + $0x18] sm:$0xff]
    %v2054 = vmul.f32 %v2050, %v2045
    %v2055 = vmul.f32 %v2051, %v2046
    %v2056 = vmul.f32 %v2052, %v2047
    %v2057 = vmul.f32 %v2053, %v2048
    %v2058 = vsel %vm103, %v2054, 0.0
    %v2059 = vsel %vm103, %v2055, 0.0
    %v2060 = vadd.f32 %v2058, %v2059
    %v2061 = vrot.slane %v2060, 4
    %v2062 = vadd.f32 %v2060, %v2061
    %v2063 = vrot.slane %v2062, 2
    %v2064 = vadd.f32 %v2062, %v2063
    %v2065 = vrot.slane %v2064, 1
    %v2066 = vadd.f32 %v2064, %v2065
    %v2067 = vsel %vm103, %v2056, 0.0
    %v2068 = vsel %vm103, %v2057, 0.0
    %v2069 = vadd.f32 %v2067, %v2068
    %v2070 = vrot.slane %v2069, 4
    %v2071 = vadd.f32 %v2069, %v2070
    %v2072 = vrot.slane %v2071, 2
    %v2073 = vadd.f32 %v2071, %v2072
    %v2074 = vrot.slane %v2073, 1
    %v2075 = vadd.f32 %v2073, %v2074
    %v2078 = vsel %vm1973, %v2075, %v2066
    %s2080 = scalar_lea.vmem [#allocation7], 4
    %2081 = vst.msk [vmem:[%s2080] sm:$0x3] %vm1976, %v2078
    %s2082 = smul.u32 6, 16
    %s2083 = scalar_lea.vmem [#allocation4], %s2082
    %v2084 = vld [vmem:[%s2083] sm:$0xff]
    %v2085 = vld [vmem:[%s2083 + $0x8] sm:$0xff]
    %v2086 = vld [vmem:[%s2083 + $0x10] sm:$0xff]
    %v2087 = vld [vmem:[%s2083 + $0x18] sm:$0xff]
    %v2088 = vmul.f32 %v2084, %v2045
    %v2089 = vmul.f32 %v2085, %v2046
    %v2090 = vmul.f32 %v2086, %v2047
    %v2091 = vmul.f32 %v2087, %v2048
    %s2092 = scalar_lea.vmem [#allocation5], %s2082
    %v2093 = vld [vmem:[%s2092] sm:$0xff]
    %v2094 = vld [vmem:[%s2092 + $0x8] sm:$0xff]
    %v2095 = vld [vmem:[%s2092 + $0x10] sm:$0xff]
    %v2096 = vld [vmem:[%s2092 + $0x18] sm:$0xff]
    %v2097 = vadd.f32 %v2088, %v2093
    %v2098 = vadd.f32 %v2089, %v2094
    %v2099 = vadd.f32 %v2090, %v2095
    %v2100 = vadd.f32 %v2091, %v2096
    %s2101 = scalar_lea.vmem [#allocation6], %s2082
    %v2102 = vld [vmem:[%s2101] sm:$0xff]
    %v2103 = vld [vmem:[%s2101 + $0x8] sm:$0xff]
    %v2104 = vld [vmem:[%s2101 + $0x10] sm:$0xff]
    %v2105 = vld [vmem:[%s2101 + $0x18] sm:$0xff]
    %v2106 = vmul.f32 %v2102, %v2097
    %v2107 = vmul.f32 %v2103, %v2098
    %v2108 = vmul.f32 %v2104, %v2099
    %v2109 = vmul.f32 %v2105, %v2100
    %v2110 = vsel %vm103, %v2106, 0.0
    %v2111 = vsel %vm103, %v2107, 0.0
    %v2112 = vadd.f32 %v2110, %v2111
    %v2113 = vrot.slane %v2112, 4
    %v2114 = vadd.f32 %v2112, %v2113
    %v2115 = vrot.slane %v2114, 2
    %v2116 = vadd.f32 %v2114, %v2115
    %v2117 = vrot.slane %v2116, 1
    %v2118 = vadd.f32 %v2116, %v2117
    %v2119 = vsel %vm103, %v2108, 0.0
    %v2120 = vsel %vm103, %v2109, 0.0
    %v2121 = vadd.f32 %v2119, %v2120
    %v2122 = vrot.slane %v2121, 4
    %v2123 = vadd.f32 %v2121, %v2122
    %v2124 = vrot.slane %v2123, 2
    %v2125 = vadd.f32 %v2123, %v2124
    %v2126 = vrot.slane %v2125, 1
    %v2127 = vadd.f32 %v2125, %v2126
    %v2130 = vsel %vm1973, %v2127, %v2118
    %s2132 = scalar_lea.vmem [#allocation7], 6
    %2133 = vst.msk [vmem:[%s2132] sm:$0x3] %vm1976, %v2130
    %s2134 = smul.u32 8, 16
    %s2135 = scalar_lea.vmem [#allocation4], %s2134
    %v2136 = vld [vmem:[%s2135] sm:$0xff]
    %v2137 = vld [vmem:[%s2135 + $0x8] sm:$0xff]
    %v2138 = vld [vmem:[%s2135 + $0x10] sm:$0xff]
    %v2139 = vld [vmem:[%s2135 + $0x18] sm:$0xff]
    %v2140 = vmul.f32 %v2136, %v2097
    %v2141 = vmul.f32 %v2137, %v2098
    %v2142 = vmul.f32 %v2138, %v2099
    %v2143 = vmul.f32 %v2139, %v2100
    %s2144 = scalar_lea.vmem [#allocation5], %s2134
    %v2145 = vld [vmem:[%s2144] sm:$0xff]
    %v2146 = vld [vmem:[%s2144 + $0x8] sm:$0xff]
    %v2147 = vld [vmem:[%s2144 + $0x10] sm:$0xff]
    %v2148 = vld [vmem:[%s2144 + $0x18] sm:$0xff]
    %v2149 = vadd.f32 %v2140, %v2145
    %v2150 = vadd.f32 %v2141, %v2146
    %v2151 = vadd.f32 %v2142, %v2147
    %v2152 = vadd.f32 %v2143, %v2148
    %s2153 = scalar_lea.vmem [#allocation6], %s2134
    %v2154 = vld [vmem:[%s2153] sm:$0xff]
    %v2155 = vld [vmem:[%s2153 + $0x8] sm:$0xff]
    %v2156 = vld [vmem:[%s2153 + $0x10] sm:$0xff]
    %v2157 = vld [vmem:[%s2153 + $0x18] sm:$0xff]
    %v2158 = vmul.f32 %v2154, %v2149
    %v2159 = vmul.f32 %v2155, %v2150
    %v2160 = vmul.f32 %v2156, %v2151
    %v2161 = vmul.f32 %v2157, %v2152
    %v2162 = vsel %vm103, %v2158, 0.0
    %v2163 = vsel %vm103, %v2159, 0.0
    %v2164 = vadd.f32 %v2162, %v2163
    %v2165 = vrot.slane %v2164, 4
    %v2166 = vadd.f32 %v2164, %v2165
    %v2167 = vrot.slane %v2166, 2
    %v2168 = vadd.f32 %v2166, %v2167
    %v2169 = vrot.slane %v2168, 1
    %v2170 = vadd.f32 %v2168, %v2169
    %v2171 = vsel %vm103, %v2160, 0.0
    %v2172 = vsel %vm103, %v2161, 0.0
    %v2173 = vadd.f32 %v2171, %v2172
    %v2174 = vrot.slane %v2173, 4
    %v2175 = vadd.f32 %v2173, %v2174
    %v2176 = vrot.slane %v2175, 2
    %v2177 = vadd.f32 %v2175, %v2176
    %v2178 = vrot.slane %v2177, 1
    %v2179 = vadd.f32 %v2177, %v2178
    %v2182 = vsel %vm1973, %v2179, %v2170
    %s2184 = scalar_lea.vmem [#allocation7], 8
    %2185 = vst.msk [vmem:[%s2184] sm:$0x3] %vm1976, %v2182
    %s2186 = smul.u32 10, 16
    %s2187 = scalar_lea.vmem [#allocation4], %s2186
    %v2188 = vld [vmem:[%s2187] sm:$0xff]
    %v2189 = vld [vmem:[%s2187 + $0x8] sm:$0xff]
    %v2190 = vld [vmem:[%s2187 + $0x10] sm:$0xff]
    %v2191 = vld [vmem:[%s2187 + $0x18] sm:$0xff]
    %v2192 = vmul.f32 %v2188, %v2149
    %v2193 = vmul.f32 %v2189, %v2150
    %v2194 = vmul.f32 %v2190, %v2151
    %v2195 = vmul.f32 %v2191, %v2152
    %s2196 = scalar_lea.vmem [#allocation5], %s2186
    %v2197 = vld [vmem:[%s2196] sm:$0xff]
    %v2198 = vld [vmem:[%s2196 + $0x8] sm:$0xff]
    %v2199 = vld [vmem:[%s2196 + $0x10] sm:$0xff]
    %v2200 = vld [vmem:[%s2196 + $0x18] sm:$0xff]
    %v2201 = vadd.f32 %v2192, %v2197
    %v2202 = vadd.f32 %v2193, %v2198
    %v2203 = vadd.f32 %v2194, %v2199
    %v2204 = vadd.f32 %v2195, %v2200
    %s2205 = scalar_lea.vmem [#allocation6], %s2186
    %v2206 = vld [vmem:[%s2205] sm:$0xff]
    %v2207 = vld [vmem:[%s2205 + $0x8] sm:$0xff]
    %v2208 = vld [vmem:[%s2205 + $0x10] sm:$0xff]
    %v2209 = vld [vmem:[%s2205 + $0x18] sm:$0xff]
    %v2210 = vmul.f32 %v2206, %v2201
    %v2211 = vmul.f32 %v2207, %v2202
    %v2212 = vmul.f32 %v2208, %v2203
    %v2213 = vmul.f32 %v2209, %v2204
    %v2214 = vsel %vm103, %v2210, 0.0
    %v2215 = vsel %vm103, %v2211, 0.0
    %v2216 = vadd.f32 %v2214, %v2215
    %v2217 = vrot.slane %v2216, 4
    %v2218 = vadd.f32 %v2216, %v2217
    %v2219 = vrot.slane %v2218, 2
    %v2220 = vadd.f32 %v2218, %v2219
    %v2221 = vrot.slane %v2220, 1
    %v2222 = vadd.f32 %v2220, %v2221
    %v2223 = vsel %vm103, %v2212, 0.0
    %v2224 = vsel %vm103, %v2213, 0.0
    %v2225 = vadd.f32 %v2223, %v2224
    %v2226 = vrot.slane %v2225, 4
    %v2227 = vadd.f32 %v2225, %v2226
    %v2228 = vrot.slane %v2227, 2
    %v2229 = vadd.f32 %v2227, %v2228
    %v2230 = vrot.slane %v2229, 1
    %v2231 = vadd.f32 %v2229, %v2230
    %v2234 = vsel %vm1973, %v2231, %v2222
    %s2236 = scalar_lea.vmem [#allocation7], 10
    %2237 = vst.msk [vmem:[%s2236] sm:$0x3] %vm1976, %v2234
    %s2238 = smul.u32 12, 16
    %s2239 = scalar_lea.vmem [#allocation4], %s2238
    %v2240 = vld [vmem:[%s2239] sm:$0xff]
    %v2241 = vld [vmem:[%s2239 + $0x8] sm:$0xff]
    %v2242 = vld [vmem:[%s2239 + $0x10] sm:$0xff]
    %v2243 = vld [vmem:[%s2239 + $0x18] sm:$0xff]
    %v2244 = vmul.f32 %v2240, %v2201
    %v2245 = vmul.f32 %v2241, %v2202
    %v2246 = vmul.f32 %v2242, %v2203
    %v2247 = vmul.f32 %v2243, %v2204
    %s2248 = scalar_lea.vmem [#allocation5], %s2238
    %v2249 = vld [vmem:[%s2248] sm:$0xff]
    %v2250 = vld [vmem:[%s2248 + $0x8] sm:$0xff]
    %v2251 = vld [vmem:[%s2248 + $0x10] sm:$0xff]
    %v2252 = vld [vmem:[%s2248 + $0x18] sm:$0xff]
    %v2253 = vadd.f32 %v2244, %v2249
    %v2254 = vadd.f32 %v2245, %v2250
    %v2255 = vadd.f32 %v2246, %v2251
    %v2256 = vadd.f32 %v2247, %v2252
    %s2257 = scalar_lea.vmem [#allocation6], %s2238
    %v2258 = vld [vmem:[%s2257] sm:$0xff]
    %v2259 = vld [vmem:[%s2257 + $0x8] sm:$0xff]
    %v2260 = vld [vmem:[%s2257 + $0x10] sm:$0xff]
    %v2261 = vld [vmem:[%s2257 + $0x18] sm:$0xff]
    %v2262 = vmul.f32 %v2258, %v2253
    %v2263 = vmul.f32 %v2259, %v2254
    %v2264 = vmul.f32 %v2260, %v2255
    %v2265 = vmul.f32 %v2261, %v2256
    %v2266 = vsel %vm103, %v2262, 0.0
    %v2267 = vsel %vm103, %v2263, 0.0
    %v2268 = vadd.f32 %v2266, %v2267
    %v2269 = vrot.slane %v2268, 4
    %v2270 = vadd.f32 %v2268, %v2269
    %v2271 = vrot.slane %v2270, 2
    %v2272 = vadd.f32 %v2270, %v2271
    %v2273 = vrot.slane %v2272, 1
    %v2274 = vadd.f32 %v2272, %v2273
    %v2275 = vsel %vm103, %v2264, 0.0
    %v2276 = vsel %vm103, %v2265, 0.0
    %v2277 = vadd.f32 %v2275, %v2276
    %v2278 = vrot.slane %v2277, 4
    %v2279 = vadd.f32 %v2277, %v2278
    %v2280 = vrot.slane %v2279, 2
    %v2281 = vadd.f32 %v2279, %v2280
    %v2282 = vrot.slane %v2281, 1
    %v2283 = vadd.f32 %v2281, %v2282
    %v2286 = vsel %vm1973, %v2283, %v2274
    %s2288 = scalar_lea.vmem [#allocation7], 12
    %2289 = vst.msk [vmem:[%s2288] sm:$0x3] %vm1976, %v2286
    %s2290 = smul.u32 14, 16
    %s2291 = scalar_lea.vmem [#allocation4], %s2290
    %v2292 = vld [vmem:[%s2291] sm:$0xff]
    %v2293 = vld [vmem:[%s2291 + $0x8] sm:$0xff]
    %v2294 = vld [vmem:[%s2291 + $0x10] sm:$0xff]
    %v2295 = vld [vmem:[%s2291 + $0x18] sm:$0xff]
    %v2296 = vmul.f32 %v2292, %v2253
    %v2297 = vmul.f32 %v2293, %v2254
    %v2298 = vmul.f32 %v2294, %v2255
    %v2299 = vmul.f32 %v2295, %v2256
    %s2300 = scalar_lea.vmem [#allocation5], %s2290
    %v2301 = vld [vmem:[%s2300] sm:$0xff]
    %v2302 = vld [vmem:[%s2300 + $0x8] sm:$0xff]
    %v2303 = vld [vmem:[%s2300 + $0x10] sm:$0xff]
    %v2304 = vld [vmem:[%s2300 + $0x18] sm:$0xff]
    %v2305 = vadd.f32 %v2296, %v2301
    %v2306 = vadd.f32 %v2297, %v2302
    %v2307 = vadd.f32 %v2298, %v2303
    %v2308 = vadd.f32 %v2299, %v2304
    %s2309 = scalar_lea.vmem [#allocation6], %s2290
    %v2310 = vld [vmem:[%s2309] sm:$0xff]
    %v2311 = vld [vmem:[%s2309 + $0x8] sm:$0xff]
    %v2312 = vld [vmem:[%s2309 + $0x10] sm:$0xff]
    %v2313 = vld [vmem:[%s2309 + $0x18] sm:$0xff]
    %v2314 = vmul.f32 %v2310, %v2305
    %v2315 = vmul.f32 %v2311, %v2306
    %v2316 = vmul.f32 %v2312, %v2307
    %v2317 = vmul.f32 %v2313, %v2308
    %v2318 = vsel %vm103, %v2314, 0.0
    %v2319 = vsel %vm103, %v2315, 0.0
    %v2320 = vadd.f32 %v2318, %v2319
    %v2321 = vrot.slane %v2320, 4
    %v2322 = vadd.f32 %v2320, %v2321
    %v2323 = vrot.slane %v2322, 2
    %v2324 = vadd.f32 %v2322, %v2323
    %v2325 = vrot.slane %v2324, 1
    %v2326 = vadd.f32 %v2324, %v2325
    %v2327 = vsel %vm103, %v2316, 0.0
    %v2328 = vsel %vm103, %v2317, 0.0
    %v2329 = vadd.f32 %v2327, %v2328
    %v2330 = vrot.slane %v2329, 4
    %v2331 = vadd.f32 %v2329, %v2330
    %v2332 = vrot.slane %v2331, 2
    %v2333 = vadd.f32 %v2331, %v2332
    %v2334 = vrot.slane %v2333, 1
    %v2335 = vadd.f32 %v2333, %v2334
    %v2338 = vsel %vm1973, %v2335, %v2326
    %s2340 = scalar_lea.vmem [#allocation7], 14
    %2341 = vst.msk [vmem:[%s2340] sm:$0x3] %vm1976, %v2338
    %2342 = vst.msk [vmem:[#allocation2] sm:$0xff] %vm103, %v2305
    %2343 = vst.msk [vmem:[#allocation2 + $0x8] sm:$0xff] %vm103, %v2306
    %2344 = vst.msk [vmem:[#allocation2 + $0x10] sm:$0xff] %vm103, %v2307
    %2345 = vst.msk [vmem:[#allocation2 + $0x18] sm:$0xff] %vm103, %v2308
    %v2346 = vld [vmem:[#allocation7] sm:$0xff]
    %v2347 = vld [vmem:[#allocation7 + $0x8] sm:$0xff]
    %v2348 = vld [vmem:[%s5] sm:$0x1]
    %v2350 = vlaneseq
    %v2351 = vshrl.u32 %v2350, 7
    %v2352 = vsub.s32 0, %v2351
    %v2353 = vrot.slane %v2348, %v2352
    %v2355 = vmul.f32 %v281, %v2353
    %v2356 = vmul.f32 %v282, %v2353
    %v2357 = vadd.f32 %v2346, %v2355
    %v2358 = vadd.f32 %v2347, %v2356
    %v2359 = vsub.f32 0.0, %v177
    %v2360 = vsub.f32 0.0, %v183
    %v2361 = vmul.f32 %v2359, 1.442695
    %v2362 = vpow.pop %v2361
    %v2363 = vmul.f32 %v2360, 1.442695
    %v2364 = vpow.pop %v2363
    %v2365 = vadd.f32 %v2362, 1.0
    %v2366 = vadd.f32 %v2364, 1.0
    %v2367 = vrcp.pop %v2365
    %v2368 = vmul.f32 1.0, %v2367
    %v2369 = vrcp.pop %v2366
    %v2370 = vmul.f32 1.0, %v2369
    %v2371 = vmul.f32 %v177, %v2368
    %v2372 = vmul.f32 %v183, %v2370
    %2375 = vrot.lane.b32.xlu0 %v2371, 96
    %v2376 = vpop.permute.xlu0 %2375
    %2377 = vrot.lane.b32.xlu0 %v2372, 96
    %v2378 = vpop.permute.xlu0 %2377
    %v2381 = vmul.f32 %v2357, %v2376
    %v2382 = vmul.f32 %v2358, %v2378
    %v2383 = vld [vmem:[#allocation14] sm:$0xff]
    %v2384 = vld [vmem:[#allocation14 + $0x8] sm:$0xff]
    %v2385 = vld [vmem:[#allocation14 + $0x10] sm:$0xff]
    %v2386 = vld [vmem:[#allocation14 + $0x18] sm:$0xff]
    %v2388 = vsel %vm103, %v2381, 0
    %v2391 = vsel %vm103, %v2382, 0
    %2393 = vmatprep.subr.mxu0 0.0
    %2394 = vmatpush1.msra.mxu0 %v2383
    %2395 = vmatprep.subr.mxu0 0.0
    %2396 = vmatpush1.msra.mxu0 %v2384
    %2397 = vmatprep.subr.mxu0 0.0
    %2398 = vmatpush1.msra.mxu0 %v2385
    %2399 = vmatprep.subr.mxu0 0.0
    %2400 = vmatpush1.msra.mxu0 %v2386
    %2401 = vmatprep.subr.mxu0 0.0
    %2402 = vmatpush1.msra.mxu0 0.0
    %2403 = vmatprep.subr.mxu0 0.0
    %2404 = vmatpush1.msra.mxu0 0.0
    %2405 = vmatprep.subr.mxu0 0.0
    %2406 = vmatpush1.msra.mxu0 0.0
    %2407 = vmatprep.subr.mxu0 0.0
    %2408 = vmatpush1.msra.mxu0 0.0
    %2409 = vmatprep.subr.mxu0 0.0
    %2410 = vmatpush1.msra.mxu0 0.0
    %2411 = vmatprep.subr.mxu0 0.0
    %2412 = vmatpush1.msra.mxu0 0.0
    %2413 = vmatprep.subr.mxu0 0.0
    %2414 = vmatpush1.msra.mxu0 0.0
    %2415 = vmatprep.subr.mxu0 0.0
    %2416 = vmatpush1.msra.mxu0 0.0
    %2417 = vmatprep.subr.mxu0 0.0
    %2418 = vmatpush1.msra.mxu0 0.0
    %2419 = vmatprep.subr.mxu0 0.0
    %2420 = vmatpush1.msra.mxu0 0.0
    %2421 = vmatprep.subr.mxu0 0.0
    %2422 = vmatpush1.msra.mxu0 0.0
    %2423 = vmatprep.subr.mxu0 0.0
    %2424 = vmatpush1.msra.mxu0 0.0
    %2425 = vmatprep.subr.mxu0 0.0
    %2426 = vmatpush1.msra.mxu0 0.0
    %2427 = vmatprep.subr.mxu0 0.0
    %2428 = vmatpush1.msra.mxu0 0.0
    %2429 = vmatprep.subr.mxu0 0.0
    %2430 = vmatpush1.msra.mxu0 0.0
    %2431 = vmatprep.subr.mxu0 0.0
    %2432 = vmatpush1.msra.mxu0 0.0
    %2433 = vmatprep.subr.mxu0 0.0
    %2434 = vmatpush1.msra.mxu0 0.0
    %2435 = vmatprep.subr.mxu0 0.0
    %2436 = vmatpush1.msra.mxu0 0.0
    %2437 = vmatprep.subr.mxu0 0.0
    %2438 = vmatpush1.msra.mxu0 0.0
    %2439 = vmatprep.subr.mxu0 0.0
    %2440 = vmatpush1.msra.mxu0 0.0
    %2441 = vmatprep.subr.mxu0 0.0
    %2442 = vmatpush1.msra.mxu0 0.0
    %2443 = vmatprep.subr.mxu0 0.0
    %2444 = vmatpush1.msra.mxu0 0.0
    %2445 = vmatprep.subr.mxu0 0.0
    %2446 = vmatpush1.msra.mxu0 0.0
    %2447 = vmatprep.subr.mxu0 0.0
    %2448 = vmatpush1.msra.mxu0 0.0
    %2449 = vmatprep.subr.mxu0 0.0
    %2450 = vmatpush1.msra.mxu0 0.0
    %2451 = vmatprep.subr.mxu0 0.0
    %2452 = vmatpush1.msra.mxu0 0.0
    %2453 = vmatprep.subr.mxu0 0.0
    %2454 = vmatpush1.msra.mxu0 0.0
    %2455 = vmatprep.subr.mxu0 0.0
    %2456 = vmatpush1.msra.mxu0 0.0
    %2457 = vmatprep.mubr.f32.mxu0 0.0
    %2458 = vmatmul.mubr.f32.gmra.mrb[0].mxu0 %v2388
    %v2459 = vpop.f32.mrb[0].mxu0
    %v2460 = vadd.f32 0.0, %v2459
    %v2461 = vpop.f32.mrb[0].mxu0
    %2462 = vmatprep.mubr.f32.mxu0 0.0
    %2463 = vmatmul.mubr.f32.gmra.mrb[0].mxu0 %v2391
    %v2464 = vpop.f32.mrb[0].mxu0
    %v2465 = vadd.f32 0.0, %v2464
    %v2466 = vpop.f32.mrb[0].mxu0
    %2467 = vdwg.mxu0
    %2468 = vst.msk [vmem:[#allocation16] sm:$0xff] %vm103, %v2460
    %2469 = vst.msk [vmem:[#allocation16 + $0x8] sm:$0xff] %vm103, %v2465
    // Predicated region
    $region54: #{tpu_custom_call.1} parent=1 // pred_check
      _
    $region55: #{tpu_custom_call.1} parent=1 // pred_check_branch
      %2471 = sbr.rel (0) target = $region57
    $region56: #{tpu_custom_call.1} parent=1 // pred_region
      %s2473 = ssub.s32 256, 256
      %2474 = vsyncadd [#allocation10], %s2473
      %s2475 = sshll.u32 [#allocation16], 4
      %s2476 = int_to_ptr.vmem [resolvable:$true] %s2475
      %2481 = dma.vmem_to_hbm [thread:$0]  %s2476, 256, %s7, [#allocation10], 128, 128, 8
    $region57: #{tpu_custom_call.1} parent=1 // pred_fallthru
      _
    // Predicated region
    $region58: #{tpu_custom_call.1} parent=1 // pred_check
      _
    $region59: #{tpu_custom_call.1} parent=1 // pred_check_branch
      %2483 = sbr.rel (0) target = $region61
    $region60: #{tpu_custom_call.1} parent=1 // pred_region
      %2484 = dma.done [#allocation10], 256
    $region61: #{tpu_custom_call.1} parent=1 // pred_fallthru
      _
    %2485 = vsyncpa [#allocation9], 1
    %2486 = vsyncpa [#allocation12], 1
    %2487 = vsyncpa [#allocation15], 1
    %2488 = vsyncpa [#allocation10], 1

</llo_original>
